<compile_context>
chip_gen: v7x
topology: tpu7x:2x2x1
jax: 0.10.0
libtpu: 0.0.40
codegen_flags: <defaults>
</compile_context>

<pallas_src>
import functools

import jax
import jax.numpy as jnp
from jax.experimental import pallas as pl
from jax.experimental.pallas import tpu as pltpu


def _round_up(n, m):
    return (n + m - 1) // m * m


def _pick_ff_tile(dfp, max_tk=2048):
    """Largest 128-aligned divisor of dfp that is <= max_tk (dfp itself if small)."""
    if dfp <= max_tk:
        return dfp
    for cand in range(max_tk, 127, -128):
        if dfp % cand == 0:
            return cand
    return dfp  # unreachable: dfp is a multiple of 128


def _vmem_limit_bytes():
    """Raise the scoped VMEM limit towards the physical capacity (with headroom)."""
    try:
        cap = pltpu.get_tpu_info().vmem_capacity_bytes
    except Exception:
        cap = 64 * 1024 * 1024  # conservative (safe on v5e/v6e/v7x)
    return int(cap * 0.8)


def _ffn_kernel(x_ref, w1_ref, b1_ref, w2_ref, b2_ref, o_ref, acc_ref):
    # x_ref:  (tm, dmp)        bf16
    # w1_ref: (dmp, tk)        bf16   block k of W1^T
    # b1_ref: (1, tk)          f32
    # w2_ref: (tk, dmp)        bf16   block k of W2^T
    # b2_ref: (1, dmp)         f32
    # o_ref:  (tm, dmp)        out dtype
    # acc_ref:(tm, dmp)        f32 scratch accumulator
    k = pl.program_id(1)

    @pl.when(k == 0)
    def _init():
        acc_ref[...] = jnp.zeros_like(acc_ref)

    # First matmul on the MXU (bf16 operands, f32 accumulation), bias, ReLU.
    h = jnp.dot(x_ref[...], w1_ref[...], preferred_element_type=jnp.float32)
    h = jnp.maximum(h + b1_ref[...], 0.0)
    # dropout == identity in eval mode.
    acc_ref[...] += jnp.dot(h.astype(w2_ref.dtype), w2_ref[...],
                            preferred_element_type=jnp.float32)

    @pl.when(k == pl.num_programs(1) - 1)
    def _finalize():
        o_ref[...] = (acc_ref[...] + b2_ref[...]).astype(o_ref.dtype)


def prepare_params(w1, b1, w2, b2, compute_dtype=jnp.bfloat16):
    """One-time (load-time) parameter prep.  NOT per-forward.

    nn.Linear stores weights as (out_features, in_features); transpose to
    row-major (in, out), pad feature dims to lane-dense multiples of 128, and
    cast MXU operands to the compute dtype (biases stay f32, added post-accum).
    """
    d_ff, d_model = w1.shape
    dmp = _round_up(d_model, 128)
    dfp = _round_up(d_ff, 128)
    w1_t = jnp.zeros((dmp, dfp), compute_dtype).at[:d_model, :d_ff].set(
        jnp.asarray(w1).T.astype(compute_dtype))
    w2_t = jnp.zeros((dfp, dmp), compute_dtype).at[:d_ff, :d_model].set(
        jnp.asarray(w2).T.astype(compute_dtype))
    b1_r = jnp.zeros((1, dfp), jnp.float32).at[0, :d_ff].set(
        jnp.asarray(b1).astype(jnp.float32))
    b2_r = jnp.zeros((1, dmp), jnp.float32).at[0, :d_model].set(
        jnp.asarray(b2).astype(jnp.float32))
    return w1_t, b1_r, w2_t, b2_r


@functools.partial(jax.jit, static_argnames=("tm", "tk_ff"))
def positionwise_ff(x, w1_t, b1_r, w2_t, b2_r, *, tm=256, tk_ff=None):
    """x: (B, S, d_model). Params from prepare_params. Returns (out, None)."""
    B, S, d_model = x.shape
    dmp, dfp = w1_t.shape
    compute_dtype = w1_t.dtype

    # Flatten tokens; pad rows to the row tile and features to the padded lane width.
    M = B * S
    Mp = _round_up(M, tm)
    xm = x.reshape(M, d_model).astype(compute_dtype)
    xm = jnp.pad(xm, ((0, Mp - M), (0, dmp - d_model)))

    # d_ff tile: full d_ff when it fits comfortably, otherwise 128-aligned blocks.
    if tk_ff is None:
        tk = _pick_ff_tile(dfp)
    else:
        tk = min(int(tk_ff), dfp)
        if dfp % tk != 0:
            raise ValueError("tk_ff must divide the (padded) d_ff")
    n_ff = dfp // tk
    n_rows = Mp // tm

    # Grid-invariant blocks get a single buffer (pure VMEM savings).
    single = pl.Buffered(1)
    w_mode = single if n_ff == 1 else None  # streamed weights keep double-buffering

    grid_spec = pltpu.PrefetchScalarGridSpec(
        num_scalar_prefetch=0,
        grid=(n_rows, n_ff),
        in_specs=[
            pl.BlockSpec((tm, dmp), lambda i, k: (i, 0)),                           # x tile
            pl.BlockSpec((dmp, tk), lambda i, k: (0, k), pipeline_mode=w_mode),     # W1^T block
            pl.BlockSpec((1, tk), lambda i, k: (0, k), pipeline_mode=w_mode),       # b1 block
            pl.BlockSpec((tk, dmp), lambda i, k: (k, 0), pipeline_mode=w_mode),     # W2^T block
            pl.BlockSpec((1, dmp), lambda i, k: (0, 0), pipeline_mode=single),      # b2
        ],
        out_specs=pl.BlockSpec((tm, dmp), lambda i, k: (i, 0)),
        scratch_shapes=[pltpu.VMEM((tm, dmp), jnp.float32)],
    )

    out = pl.pallas_call(
        _ffn_kernel,
        out_shape=jax.ShapeDtypeStruct((Mp, dmp), x.dtype),
        grid_spec=grid_spec,
        compiler_params=pltpu.CompilerParams(
            dimension_semantics=("parallel", "arbitrary"),
            vmem_limit_bytes=_vmem_limit_bytes(),
        ),
    )(xm, w1_t, b1_r, w2_t, b2_r)

    out = out[:M, :d_model].reshape(B, S, d_model)
    return out, None


def init_params(key, d_model, d_ff, dtype=jnp.float32):
    """Deterministic init matching nn.Linear parameter shapes."""
    k1, k2, k3, k4 = jax.random.split(key, 4)
    lim1 = 1.0 / (d_model ** 0.5)
    lim2 = 1.0 / (d_ff ** 0.5)
    w1 = jax.random.uniform(k1, (d_ff, d_model), dtype, -lim1, lim1)
    b1 = jax.random.uniform(k2, (d_ff,), dtype, -lim1, lim1)
    w2 = jax.random.uniform(k3, (d_model, d_ff), dtype, -lim2, lim2)
    b2 = jax.random.uniform(k4, (d_model,), dtype, -lim2, lim2)
    return w1, b1, w2, b2


if __name__ == "__main__":
    key = jax.random.PRNGKey(0)
    # Small but lane-dense shapes: M = 4*96 = 384 tokens (exercises the ragged
    # row pad to 512), d_model = 128 (lane-dense), d_ff = 512.
    B, S, d_model, d_ff = 4, 96, 128, 512

    kx, kp = jax.random.split(key)
    x = jax.random.normal(kx, (B, S, d_model), jnp.float32)
    w1, b1, w2, b2 = init_params(kp, d_model, d_ff)

    # One-time parameter prep (transpose + bf16 cast + lane padding).
    params = prepare_params(w1, b1, w2, b2)

    # Path 1: d_ff tiled -> accumulator pattern (grid = (2, 2)).
    out1, aux = positionwise_ff(x, *params, tm=256, tk_ff=256)
    out1 = jax.block_until_ready(out1)
    assert aux is None
    assert out1.shape == (B, S, d_model)

    # Path 2: full-resident, single-buffered weights (grid = (2, 1)).
    out2, _ = positionwise_ff(x, *params, tm=256)
    out2 = jax.block_until_ready(out2)

    # Reference in plain JAX f32 (dropout = identity in eval mode).
    ref = jnp.maximum(x @ w1.T + b1, 0.0) @ w2.T + b2
    assert jnp.allclose(out1, ref, atol=3e-2, rtol=3e-2), "tiled path mismatch vs reference"
    assert jnp.allclose(out2, ref, atol=3e-2, rtol=3e-2), "resident path mismatch vs reference"
    assert jnp.allclose(out1, out2, atol=1e-4, rtol=1e-4), "tiled vs resident mismatch"

    print("KERNEL_OK")
</pallas_src>

<mosaic_0001>
module attributes {stable_mosaic.version = 11 : i64} {
  func.func @_ffn_kernel(%arg0: i32, %arg1: i32, %arg2: memref<256x128xbf16, #tpu.memory_space<vmem>>, %arg3: memref<128x256xbf16, #tpu.memory_space<vmem>>, %arg4: memref<1x256xf32, #tpu.memory_space<vmem>>, %arg5: memref<256x128xbf16, #tpu.memory_space<vmem>>, %arg6: memref<1x128xf32, #tpu.memory_space<vmem>>, %arg7: memref<256x128xf32, #tpu.memory_space<vmem>>, %arg8: memref<256x128xf32, #tpu.memory_space<vmem>>) attributes {dimension_semantics = [#tpu.dimension_semantics<parallel>, #tpu.dimension_semantics<arbitrary>], iteration_bounds = array<i64: 2, 2>, scalar_prefetch = 0 : i64, scratch_operands = 1 : i64, tpu.core_type = #tpu.core_type<tc>, window_params = [{transform_indices = @transform_0, window_bounds = array<i64: 256, 128>}, {transform_indices = @transform_1, window_bounds = array<i64: 128, 256>}, {transform_indices = @transform_2, window_bounds = array<i64: 1, 256>}, {transform_indices = @transform_3, window_bounds = array<i64: 256, 128>}, {pipeline_mode = #tpu.pipeline_mode<synchronous>, transform_indices = @transform_4, window_bounds = array<i64: 1, 128>}, {transform_indices = @transform_5, window_bounds = array<i64: 256, 128>}]} {
    %c0_i32 = arith.constant 0 : i32
    %0 = arith.cmpi eq, %arg1, %c0_i32 : i32
    %1 = arith.extui %0 : i1 to i32
    %c0_i32_0 = arith.constant 0 : i32
    %2 = arith.cmpi ne, %1, %c0_i32_0 : i32
    scf.if %2 {
      %cst_15 = arith.constant 0.000000e+00 : f32
      %20 = vector.broadcast %cst_15 : f32 to vector<256x128xf32>
      %c0_16 = arith.constant 0 : index
      %c0_17 = arith.constant 0 : index
      %21 = vector.load %arg8[%c0_16, %c0_17] : memref<256x128xf32, #tpu.memory_space<vmem>>, vector<256x128xf32>
      tpu.vector_store %arg8[%c0_16, %c0_17], %20 {strides = array<i32>} : memref<256x128xf32, #tpu.memory_space<vmem>>, vector<256x128xf32>,
    } else {
    }
    %c0 = arith.constant 0 : index
    %c0_1 = arith.constant 0 : index
    %3 = vector.load %arg2[%c0, %c0_1] : memref<256x128xbf16, #tpu.memory_space<vmem>>, vector<256x128xbf16>
    %c0_2 = arith.constant 0 : index
    %c0_3 = arith.constant 0 : index
    %4 = vector.load %arg3[%c0_2, %c0_3] : memref<128x256xbf16, #tpu.memory_space<vmem>>, vector<128x256xbf16>
    %cst = arith.constant dense<0.000000e+00> : vector<256x256xf32>
    %5 = tpu.matmul %3, %4, %cst {dimension_numbers = #tpu.dot_dimension_numbers<[1], [0], [0], [1], [0, 0, 1, 1], [], []>} : vector<256x128xbf16>, vector<128x256xbf16>, vector<256x256xf32> -> vector<256x256xf32>
    %c0_4 = arith.constant 0 : index
    %c0_5 = arith.constant 0 : index
    %6 = vector.load %arg4[%c0_4, %c0_5] : memref<1x256xf32, #tpu.memory_space<vmem>>, vector<1x256xf32>
    %7 = vector.broadcast %6 : vector<1x256xf32> to vector<256x256xf32>
    %8 = arith.addf %5, %7 : vector<256x256xf32>
    %cst_6 = arith.constant 0.000000e+00 : f32
    %9 = vector.broadcast %cst_6 : f32 to vector<256x256xf32>
    %10 = arith.maximumf %8, %9 : vector<256x256xf32>
    %c0_7 = arith.constant 0 : index
    %c0_8 = arith.constant 0 : index
    %11 = vector.load %arg8[%c0_7, %c0_8] : memref<256x128xf32, #tpu.memory_space<vmem>>, vector<256x128xf32>
    %12 = arith.truncf %10 : vector<256x256xf32> to vector<256x256xbf16>
    %c0_9 = arith.constant 0 : index
    %c0_10 = arith.constant 0 : index
    %13 = vector.load %arg5[%c0_9, %c0_10] : memref<256x128xbf16, #tpu.memory_space<vmem>>, vector<256x128xbf16>
    %cst_11 = arith.constant dense<0.000000e+00> : vector<256x128xf32>
    %14 = tpu.matmul %12, %13, %cst_11 {dimension_numbers = #tpu.dot_dimension_numbers<[1], [0], [0], [1], [0, 0, 1, 1], [], []>} : vector<256x256xbf16>, vector<256x128xbf16>, vector<256x128xf32> -> vector<256x128xf32>
    %15 = arith.addf %11, %14 : vector<256x128xf32>
    %c0_12 = arith.constant 0 : index
    %c0_13 = arith.constant 0 : index
    %16 = vector.load %arg8[%c0_12, %c0_13] : memref<256x128xf32, #tpu.memory_space<vmem>>, vector<256x128xf32>
    tpu.vector_store %arg8[%c0_12, %c0_13], %15 {strides = array<i32>} : memref<256x128xf32, #tpu.memory_space<vmem>>, vector<256x128xf32>,
    %c1_i32 = arith.constant 1 : i32
    %17 = arith.cmpi eq, %arg1, %c1_i32 : i32
    %18 = arith.extui %17 : i1 to i32
    %c0_i32_14 = arith.constant 0 : i32
    %19 = arith.cmpi ne, %18, %c0_i32_14 : i32
    scf.if %19 {
      %c0_15 = arith.constant 0 : index
      %c0_16 = arith.constant 0 : index
      %20 = vector.load %arg8[%c0_15, %c0_16] : memref<256x128xf32, #tpu.memory_space<vmem>>, vector<256x128xf32>
      %c0_17 = arith.constant 0 : index
      %c0_18 = arith.constant 0 : index
      %21 = vector.load %arg6[%c0_17, %c0_18] : memref<1x128xf32, #tpu.memory_space<vmem>>, vector<1x128xf32>
      %22 = vector.broadcast %21 : vector<1x128xf32> to vector<256x128xf32>
      %23 = arith.addf %20, %22 : vector<256x128xf32>
      %c0_19 = arith.constant 0 : index
      %c0_20 = arith.constant 0 : index
      %24 = vector.load %arg7[%c0_19, %c0_20] : memref<256x128xf32, #tpu.memory_space<vmem>>, vector<256x128xf32>
      tpu.vector_store %arg7[%c0_19, %c0_20], %23 {strides = array<i32>} : memref<256x128xf32, #tpu.memory_space<vmem>>, vector<256x128xf32>,
    } else {
    }
    return
  }
  func.func @transform_0(%arg0: i32, %arg1: i32) -> (i32, i32) {
    %c0_i32 = arith.constant 0 : i32
    %c0_i32_0 = arith.constant 0 : i32
    return %arg0, %c0_i32 : i32, i32
  }
  func.func @transform_1(%arg0: i32, %arg1: i32) -> (i32, i32) {
    %c0_i32 = arith.constant 0 : i32
    %c0_i32_0 = arith.constant 0 : i32
    return %c0_i32, %arg1 : i32, i32
  }
  func.func @transform_2(%arg0: i32, %arg1: i32) -> (i32, i32) {
    %c0_i32 = arith.constant 0 : i32
    %c0_i32_0 = arith.constant 0 : i32
    return %c0_i32, %arg1 : i32, i32
  }
  func.func @transform_3(%arg0: i32, %arg1: i32) -> (i32, i32) {
    %c0_i32 = arith.constant 0 : i32
    %c0_i32_0 = arith.constant 0 : i32
    return %arg1, %c0_i32 : i32, i32
  }
  func.func @transform_4(%arg0: i32, %arg1: i32) -> (i32, i32) {
    %c0_i32 = arith.constant 0 : i32
    %c0_i32_0 = arith.constant 0 : i32
    %c0_i32_1 = arith.constant 0 : i32
    return %c0_i32, %c0_i32_0 : i32, i32
  }
  func.func @transform_5(%arg0: i32, %arg1: i32) -> (i32, i32) {
    %c0_i32 = arith.constant 0 : i32
    %c0_i32_0 = arith.constant 0 : i32
    return %arg0, %c0_i32 : i32, i32
  }
}

</mosaic_0001>

<llo_original>
// kernel: positionwise_ff.1
$region0: #{positionwise_ff.1}
  #allocation0 [shape = 'u32[]', space=smem, size = 0x4, offset = 0x4, fixed_abs, tag = 'smem constant byte address 0x4 - core index']
  #allocation1 [shape = 'u32[144,128]{1,0:T(1,128)}', space=vmem, size = 0x12000, scoped, tag = 'internal scratch']
  #allocation2 [shape = 'f32[256,128]{1,0:T(8,128)}', space=vmem, size = 0x20000, scoped, tag = 'scratch operand']
  %s0 = inlined_call_operand.vmem [shape: bf16[512,128], index: 0, kind: input, shape index: {}]
  %s1 = inlined_call_operand.vmem [shape: bf16[128,512], index: 1, kind: input, shape index: {}]
  %s2 = inlined_call_operand.vmem [shape: f32[1,512], index: 2, kind: input, shape index: {}]
  %s3 = inlined_call_operand.vmem [shape: bf16[512,128], index: 3, kind: input, shape index: {}]
  %s4 = inlined_call_operand.vmem [shape: f32[1,128], index: 4, kind: input, shape index: {}]
  %s5 = inlined_call_operand.vmem [shape: f32[512,128], index: 5, kind: output, shape index: {}]
  %s6 = sld [smem:[#allocation0]]
  $region99: #{positionwise_ff.1} parent=0
    _
  %s8 = ssub.s32 1, %s6
  %s9 = scalar_select 0, %s8, %s6
  $region1: #{positionwise_ff.1} parent=0
    #allocation3 [shape = 'u8[131072]{0}', space=vmem, size = 0x20000, scoped, tag = 'input window, operand 1']
    loop: start=0, step=1, limit=6
    $region2: #{positionwise_ff.1} parent=1 // loop_pre_header
      _
    $region3: #{positionwise_ff.1} parent=1 // loop_header
      %s11 = sphi 0, %s15
      %p12 = scmp.ge.s32.totalorder %s11, 6
      %s18 = sphi 0, %s30
      %s19 = sphi 0, %s26
      %s20 = sphi 0, %s18
      %s21 = sphi 0, %s19
      %s22 = sphi 0, %s20
      %s23 = sphi 0, %s21
      %s33 = sphi 0, %s35
      %s36 = sphi 0, %s33
      %s37 = sphi 0, %s36
      %s53 = sphi 0, %s37
      %s59 = sphi 0, %s61
      %s62 = sphi 0, %s59
      %s63 = sphi 0, %s62
      %s79 = sphi 0, %s63
      %s85 = sphi 0, %s87
      %s88 = sphi 0, %s85
      %s89 = sphi 0, %s88
      %s105 = sphi 0, %s89
      %s111 = sphi 0, %s113
      %s114 = sphi 0, %s111
      %s115 = sphi 0, %s114
      %s131 = sphi 0, %s115
      %s135 = sphi 0, %s135
      %s137 = sphi 0, %s135
      %s138 = sphi 0, %s137
      %s152 = sphi 0, %s138
      %s158 = sphi 0, %s160
      %s161 = sphi 0, %s158
      %s162 = sphi 0, %s161
      %s178 = sphi 0, %s162
    $region4: #{positionwise_ff.1} parent=1 // loop_header_branch
      %14 = sbr.rel (%p12) target = $region8
    $region5: #{positionwise_ff.1} parent=1 // loop_body
      %s16 = ssub.s32 %s11, 1
      %s17 = ssub.s32 %s11, 2
      %s24 = sadd.s32 1, %s19
      %p25 = scmp.ge.s32.totalorder %s24, 2
      %s26 = scalar_select %p25, 0, %s24
      %s27 = sadd.s32 1, %s18
      %s28 = scalar_select %p25, %s27, %s18
      %p29 = scmp.ge.s32.totalorder %s28, 2
      %s30 = scalar_select %p29, 0, %s28
      %s31 = ssub.s32 %s18, %s30
      %p32 = scmp.eq.s32.totalorder %s31, 0
      %s34 = sadd.s32 %s33, 1
      %s35 = scalar_select %p32, %s33, %s34
      %p38 = pneg %p32
      %p39 = scmp.eq.s32.totalorder %s11, 3
      %p40 = por %p38, %p39
      %p41 = scmp.ne.s32.totalorder %s33, %s36
      %p42 = scmp.eq.s32.totalorder %s11, 0
      %p43 = por %p41, %p42
      %p44 = scmp.ne.s32.totalorder %s33, %s36
      %p45 = scmp.eq.s32.totalorder %s16, 3
      %p46 = por %p44, %p45
      %p47 = scmp.ne.s32.totalorder %s36, %s37
      %p48 = scmp.eq.s32.totalorder %s16, 0
      %p49 = por %p47, %p48
      %p50 = scmp.ne.s32.totalorder %s36, %s37
      %p51 = scmp.eq.s32.totalorder %s17, 3
      %p52 = por %p50, %p51
      %p54 = scmp.ne.s32.totalorder %s37, %s53
      %p55 = scmp.eq.s32.totalorder %s17, 0
      %p56 = por %p54, %p55
      %s57 = ssub.s32 %s19, %s26
      %p58 = scmp.eq.s32.totalorder %s57, 0
      %s60 = sadd.s32 %s59, 1
      %s61 = scalar_select %p58, %s59, %s60
      %p64 = pneg %p58
      %p65 = scmp.eq.s32.totalorder %s11, 3
      %p66 = por %p64, %p65
      %p67 = scmp.ne.s32.totalorder %s59, %s62
      %p68 = scmp.eq.s32.totalorder %s11, 0
      %p69 = por %p67, %p68
      %p70 = scmp.ne.s32.totalorder %s59, %s62
      %p71 = scmp.eq.s32.totalorder %s16, 3
      %p72 = por %p70, %p71
      %p73 = scmp.ne.s32.totalorder %s62, %s63
      %p74 = scmp.eq.s32.totalorder %s16, 0
      %p75 = por %p73, %p74
      %p76 = scmp.ne.s32.totalorder %s62, %s63
      %p77 = scmp.eq.s32.totalorder %s17, 3
      %p78 = por %p76, %p77
      %p80 = scmp.ne.s32.totalorder %s63, %s79
      %p81 = scmp.eq.s32.totalorder %s17, 0
      %p82 = por %p80, %p81
      %s83 = ssub.s32 %s19, %s26
      %p84 = scmp.eq.s32.totalorder %s83, 0
      %s86 = sadd.s32 %s85, 1
      %s87 = scalar_select %p84, %s85, %s86
      %p90 = pneg %p84
      %p91 = scmp.eq.s32.totalorder %s11, 3
      %p92 = por %p90, %p91
      %p93 = scmp.ne.s32.totalorder %s85, %s88
      %p94 = scmp.eq.s32.totalorder %s11, 0
      %p95 = por %p93, %p94
      %p96 = scmp.ne.s32.totalorder %s85, %s88
      %p97 = scmp.eq.s32.totalorder %s16, 3
      %p98 = por %p96, %p97
      %p99 = scmp.ne.s32.totalorder %s88, %s89
      %p100 = scmp.eq.s32.totalorder %s16, 0
      %p101 = por %p99, %p100
      %p102 = scmp.ne.s32.totalorder %s88, %s89
      %p103 = scmp.eq.s32.totalorder %s17, 3
      %p104 = por %p102, %p103
      %p106 = scmp.ne.s32.totalorder %s89, %s105
      %p107 = scmp.eq.s32.totalorder %s17, 0
      %p108 = por %p106, %p107
      %s109 = ssub.s32 %s19, %s26
      %p110 = scmp.eq.s32.totalorder %s109, 0
      %s112 = sadd.s32 %s111, 1
      %s113 = scalar_select %p110, %s111, %s112
      %p116 = pneg %p110
      %p117 = scmp.eq.s32.totalorder %s11, 3
      %p118 = por %p116, %p117
      %p119 = scmp.ne.s32.totalorder %s111, %s114
      %p120 = scmp.eq.s32.totalorder %s11, 0
      %p121 = por %p119, %p120
      %p122 = scmp.ne.s32.totalorder %s111, %s114
      %p123 = scmp.eq.s32.totalorder %s16, 3
      %p124 = por %p122, %p123
      %p125 = scmp.ne.s32.totalorder %s114, %s115
      %p126 = scmp.eq.s32.totalorder %s16, 0
      %p127 = por %p125, %p126
      %p128 = scmp.ne.s32.totalorder %s114, %s115
      %p129 = scmp.eq.s32.totalorder %s17, 3
      %p130 = por %p128, %p129
      %p132 = scmp.ne.s32.totalorder %s115, %s131
      %p133 = scmp.eq.s32.totalorder %s17, 0
      %p134 = por %p132, %p133
      %s136 = sadd.s32 %s135, 1
      %p139 = scmp.eq.s32.totalorder %s11, 3
      %p140 = scmp.ne.s32.totalorder %s135, %s137
      %p141 = scmp.eq.s32.totalorder %s11, 0
      %p142 = por %p140, %p141
      %p143 = scmp.ne.s32.totalorder %s135, %s137
      %p144 = scmp.eq.s32.totalorder %s16, 3
      %p145 = por %p143, %p144
      %p146 = scmp.ne.s32.totalorder %s137, %s138
      %p147 = scmp.eq.s32.totalorder %s16, 0
      %p148 = por %p146, %p147
      %p149 = scmp.ne.s32.totalorder %s137, %s138
      %p150 = scmp.eq.s32.totalorder %s17, 3
      %p151 = por %p149, %p150
      %p153 = scmp.ne.s32.totalorder %s138, %s152
      %p154 = scmp.eq.s32.totalorder %s17, 0
      %p155 = por %p153, %p154
      %s156 = ssub.s32 %s18, %s30
      %p157 = scmp.eq.s32.totalorder %s156, 0
      %s159 = sadd.s32 %s158, 1
      %s160 = scalar_select %p157, %s158, %s159
      %p163 = pneg %p157
      %p164 = scmp.eq.s32.totalorder %s11, 3
      %p165 = por %p163, %p164
      %p166 = scmp.ne.s32.totalorder %s158, %s161
      %p167 = scmp.eq.s32.totalorder %s11, 0
      %p168 = por %p166, %p167
      %p169 = scmp.ne.s32.totalorder %s158, %s161
      %p170 = scmp.eq.s32.totalorder %s16, 3
      %p171 = por %p169, %p170
      %p172 = scmp.ne.s32.totalorder %s161, %s162
      %p173 = scmp.eq.s32.totalorder %s16, 0
      %p174 = por %p172, %p173
      %p175 = scmp.ne.s32.totalorder %s161, %s162
      %p176 = scmp.eq.s32.totalorder %s17, 3
      %p177 = por %p175, %p176
      %p179 = scmp.ne.s32.totalorder %s162, %s178
      %p180 = scmp.eq.s32.totalorder %s17, 0
      %p181 = por %p179, %p180
      %p182 = scmp.le.s32.totalorder 1, %s11
      %p183 = scmp.lt.s32.totalorder %s11, 5
      %p184 = pnand %p182, %p183
      %p185 = pneg %p184
      // Predicated region
      $region9: #{positionwise_ff.1} parent=5 // pred_check
        _
      $region10: #{positionwise_ff.1} parent=5 // pred_check_branch
        %187 = sbr.rel (%p184) target = $region12
      $region11: #{positionwise_ff.1} parent=5 // pred_region
        %s188 = ssub.s32 %s11, 1
        // Predicated region
        $region13: #{positionwise_ff.1} parent=11 // pred_check
          %p189 = pneg %p148
        $region14: #{positionwise_ff.1} parent=11 // pred_check_branch
          %191 = sbr.rel (%p189) target = $region16
        $region15: #{positionwise_ff.1} parent=11 // pred_region
          _
        $region16: #{positionwise_ff.1} parent=11 // pred_fallthru
          _
      $region12: #{positionwise_ff.1} parent=5 // pred_fallthru
        _
      %p192 = scmp.lt.s32.totalorder %s11, 4
      // Predicated region
      $region17: #{positionwise_ff.1} parent=5 // pred_check
        %p193 = pneg %p192
      $region18: #{positionwise_ff.1} parent=5 // pred_check_branch
        %195 = sbr.rel (%p193) target = $region20
      $region19: #{positionwise_ff.1} parent=5 // pred_region
        // Predicated region
        $region21: #{positionwise_ff.1} parent=19 // pred_check
          %p196 = pneg %p43
        $region22: #{positionwise_ff.1} parent=19 // pred_check_branch
          %198 = sbr.rel (%p196) target = $region24
        $region23: #{positionwise_ff.1} parent=19 // pred_region
          %s199 = smul.u32 32, %s18
          %p200 = scmp.lt.s32.totalorder %s199, 63
          %s201 = scalar_select %p200, %s199, 63
          %s202 = smul.addr %s201, 4
          %s203 = scalar_lea.vmem %s0, %s202
          %s204 = smul.u32 32, %s18
        $region24: #{positionwise_ff.1} parent=19 // pred_fallthru
          _
        // Predicated region
        $region25: #{positionwise_ff.1} parent=19 // pred_check
          %p205 = pneg %p69
        $region26: #{positionwise_ff.1} parent=19 // pred_check_branch
          %207 = sbr.rel (%p205) target = $region28
        $region27: #{positionwise_ff.1} parent=19 // pred_region
          %s208 = sand.u32 %s59, 1
          %s209 = sand.u32 %s59, 1
          %s210 = smul.addr %s209, 128
          %s211 = scalar_lea.vmem [#allocation3], %s210
          %s212 = smul.u32 2, %s19
          %s213 = smul.addr %s212, 4
          %s214 = scalar_lea.vmem %s1, %s213
          // Predicated region
          $region29: #{positionwise_ff.1} parent=27 // pred_check
            _
          $region30: #{positionwise_ff.1} parent=27 // pred_check_branch
            %216 = sbr.rel (0) target = $region32
          $region31: #{positionwise_ff.1} parent=27 // pred_region
            // Predicated region
            $region33: #{positionwise_ff.1} parent=31 // pred_check
              _
            $region34: #{positionwise_ff.1} parent=31 // pred_check_branch
              %218 = sbr.rel (0) target = $region36
            $region35: #{positionwise_ff.1} parent=31 // pred_region
              // Predicated region
              $region48: #{positionwise_ff.1} parent=35 // pred_check
                _
              $region49: #{positionwise_ff.1} parent=35 // pred_check_branch
                %263 = sbr.rel (0) target = $region51
              $region50: #{positionwise_ff.1} parent=35 // pred_region
                loop: start=0, step=1, limit=1
                $region52: #{positionwise_ff.1} parent=50 // loop_pre_header
                  _
                $region53: #{positionwise_ff.1} parent=50 // loop_header
                  %s265 = sphi 0, %s269
                  %p266 = scmp.ge.s32.totalorder %s265, 1
                  %s270 = sphi %s214, %s214
                  %s271 = sphi %s211, %s211
                $region54: #{positionwise_ff.1} parent=50 // loop_header_branch
                  %268 = sbr.rel (%p266) target = $region58
                $region55: #{positionwise_ff.1} parent=50 // loop_body
                  %v272 = vld [vmem:[%s270] sm:$0xff]
                  %273 = vst [vmem:[%s271] sm:$0xff] %v272
                  %v274 = vld [vmem:[%s270 + $0x10] sm:$0xff]
                  %275 = vst [vmem:[%s271 + $0x8] sm:$0xff] %v274
                  %v276 = vld [vmem:[%s270 + $0x20] sm:$0xff]
                  %277 = vst [vmem:[%s271 + $0x10] sm:$0xff] %v276
                  %v278 = vld [vmem:[%s270 + $0x30] sm:$0xff]
                  %279 = vst [vmem:[%s271 + $0x18] sm:$0xff] %v278
                  %v280 = vld [vmem:[%s270 + $0x40] sm:$0xff]
                  %281 = vst [vmem:[%s271 + $0x20] sm:$0xff] %v280
                  %v282 = vld [vmem:[%s270 + $0x50] sm:$0xff]
                  %283 = vst [vmem:[%s271 + $0x28] sm:$0xff] %v282
                  %v284 = vld [vmem:[%s270 + $0x60] sm:$0xff]
                  %285 = vst [vmem:[%s271 + $0x30] sm:$0xff] %v284
                  %v286 = vld [vmem:[%s270 + $0x70] sm:$0xff]
                  %287 = vst [vmem:[%s271 + $0x38] sm:$0xff] %v286
                  %v288 = vld [vmem:[%s270 + $0x80] sm:$0xff]
                  %289 = vst [vmem:[%s271 + $0x40] sm:$0xff] %v288
                  %v290 = vld [vmem:[%s270 + $0x90] sm:$0xff]
                  %291 = vst [vmem:[%s271 + $0x48] sm:$0xff] %v290
                  %v292 = vld [vmem:[%s270 + $0xa0] sm:$0xff]
                  %293 = vst [vmem:[%s271 + $0x50] sm:$0xff] %v292
                  %v294 = vld [vmem:[%s270 + $0xb0] sm:$0xff]
                  %295 = vst [vmem:[%s271 + $0x58] sm:$0xff] %v294
                  %v296 = vld [vmem:[%s270 + $0xc0] sm:$0xff]
                  %297 = vst [vmem:[%s271 + $0x60] sm:$0xff] %v296
                  %v298 = vld [vmem:[%s270 + $0xd0] sm:$0xff]
                  %299 = vst [vmem:[%s271 + $0x68] sm:$0xff] %v298
                  %v300 = vld [vmem:[%s270 + $0xe0] sm:$0xff]
                  %301 = vst [vmem:[%s271 + $0x70] sm:$0xff] %v300
                  %v302 = vld [vmem:[%s270 + $0xf0] sm:$0xff]
                  %303 = vst [vmem:[%s271 + $0x78] sm:$0xff] %v302
                $region56: #{positionwise_ff.1} parent=50 // loop_footer
                  %s269 = sadd.s32 1, %s265
                $region57: #{positionwise_ff.1} parent=50 // loop_footer_branch
                  %264 = sbr.rel target = $region53
                $region58: #{positionwise_ff.1} parent=50 // loop_exit
                  _
              $region51: #{positionwise_ff.1} parent=35 // pred_fallthru
                _
              // Predicated region
              $region59: #{positionwise_ff.1} parent=35 // pred_check
                _
              $region60: #{positionwise_ff.1} parent=35 // pred_check_branch
                %305 = sbr.rel target = $region62
              $region61: #{positionwise_ff.1} parent=35 // pred_region
                _
              $region62: #{positionwise_ff.1} parent=35 // pred_fallthru
                _
            $region36: #{positionwise_ff.1} parent=31 // pred_fallthru
              _
            // Predicated region
            $region37: #{positionwise_ff.1} parent=31 // pred_check
              _
            $region38: #{positionwise_ff.1} parent=31 // pred_check_branch
              %220 = sbr.rel target = $region40
            $region39: #{positionwise_ff.1} parent=31 // pred_region
              loop: start=0, step=1, limit=1
              $region41: #{positionwise_ff.1} parent=39 // loop_pre_header
                _
              $region42: #{positionwise_ff.1} parent=39 // loop_header
                %s223 = sphi 0, %s227
                %p224 = scmp.ge.s32.totalorder %s223, 1
                %s228 = sphi %s214, %s214
                %s229 = sphi %s211, %s211
              $region43: #{positionwise_ff.1} parent=39 // loop_header_branch
                %226 = sbr.rel (%p224) target = $region47
              $region44: #{positionwise_ff.1} parent=39 // loop_body
                %v230 = vld [vmem:[%s228] sm:$0xff]
                %231 = vst [vmem:[%s229] sm:$0xff] %v230
                %v232 = vld [vmem:[%s228 + $0x10] sm:$0xff]
                %233 = vst [vmem:[%s229 + $0x8] sm:$0xff] %v232
                %v234 = vld [vmem:[%s228 + $0x20] sm:$0xff]
                %235 = vst [vmem:[%s229 + $0x10] sm:$0xff] %v234
                %v236 = vld [vmem:[%s228 + $0x30] sm:$0xff]
                %237 = vst [vmem:[%s229 + $0x18] sm:$0xff] %v236
                %v238 = vld [vmem:[%s228 + $0x40] sm:$0xff]
                %239 = vst [vmem:[%s229 + $0x20] sm:$0xff] %v238
                %v240 = vld [vmem:[%s228 + $0x50] sm:$0xff]
                %241 = vst [vmem:[%s229 + $0x28] sm:$0xff] %v240
                %v242 = vld [vmem:[%s228 + $0x60] sm:$0xff]
                %243 = vst [vmem:[%s229 + $0x30] sm:$0xff] %v242
                %v244 = vld [vmem:[%s228 + $0x70] sm:$0xff]
                %245 = vst [vmem:[%s229 + $0x38] sm:$0xff] %v244
                %v246 = vld [vmem:[%s228 + $0x80] sm:$0xff]
                %247 = vst [vmem:[%s229 + $0x40] sm:$0xff] %v246
                %v248 = vld [vmem:[%s228 + $0x90] sm:$0xff]
                %249 = vst [vmem:[%s229 + $0x48] sm:$0xff] %v248
                %v250 = vld [vmem:[%s228 + $0xa0] sm:$0xff]
                %251 = vst [vmem:[%s229 + $0x50] sm:$0xff] %v250
                %v252 = vld [vmem:[%s228 + $0xb0] sm:$0xff]
                %253 = vst [vmem:[%s229 + $0x58] sm:$0xff] %v252
                %v254 = vld [vmem:[%s228 + $0xc0] sm:$0xff]
                %255 = vst [vmem:[%s229 + $0x60] sm:$0xff] %v254
                %v256 = vld [vmem:[%s228 + $0xd0] sm:$0xff]
                %257 = vst [vmem:[%s229 + $0x68] sm:$0xff] %v256
                %v258 = vld [vmem:[%s228 + $0xe0] sm:$0xff]
                %259 = vst [vmem:[%s229 + $0x70] sm:$0xff] %v258
                %v260 = vld [vmem:[%s228 + $0xf0] sm:$0xff]
                %261 = vst [vmem:[%s229 + $0x78] sm:$0xff] %v260
              $region45: #{positionwise_ff.1} parent=39 // loop_footer
                %s227 = sadd.s32 1, %s223
              $region46: #{positionwise_ff.1} parent=39 // loop_footer_branch
                %222 = sbr.rel target = $region42
              $region47: #{positionwise_ff.1} parent=39 // loop_exit
                _
            $region40: #{positionwise_ff.1} parent=31 // pred_fallthru
              _
          $region32: #{positionwise_ff.1} parent=27 // pred_fallthru
            _
          %306 = vnop
        $region28: #{positionwise_ff.1} parent=19 // pred_fallthru
          _
        // Predicated region
        $region63: #{positionwise_ff.1} parent=19 // pred_check
          %p307 = pneg %p95
        $region64: #{positionwise_ff.1} parent=19 // pred_check_branch
          %309 = sbr.rel (%p307) target = $region66
        $region65: #{positionwise_ff.1} parent=19 // pred_region
          %s310 = smul.u32 2, %s19
          %p311 = scmp.lt.s32.totalorder %s310, 3
          %s312 = scalar_select %p311, %s310, 3
          %s313 = scalar_lea.vmem %s2, %s312
          %s314 = smul.u32 2, %s19
        $region66: #{positionwise_ff.1} parent=19 // pred_fallthru
          _
        // Predicated region
        $region67: #{positionwise_ff.1} parent=19 // pred_check
          %p315 = pneg %p121
        $region68: #{positionwise_ff.1} parent=19 // pred_check_branch
          %317 = sbr.rel (%p315) target = $region70
        $region69: #{positionwise_ff.1} parent=19 // pred_region
          %s318 = smul.u32 32, %s19
          %p319 = scmp.lt.s32.totalorder %s318, 63
          %s320 = scalar_select %p319, %s318, 63
          %s321 = smul.addr %s320, 4
          %s322 = scalar_lea.vmem %s3, %s321
          %s323 = smul.u32 32, %s19
        $region70: #{positionwise_ff.1} parent=19 // pred_fallthru
          _
      $region20: #{positionwise_ff.1} parent=5 // pred_fallthru
        _
      %p324 = scmp.le.s32.totalorder 1, %s11
      %p325 = scmp.lt.s32.totalorder %s11, 5
      %p326 = pnand %p324, %p325
      %p327 = pneg %p326
      // Predicated region
      $region71: #{positionwise_ff.1} parent=5 // pred_check
        _
      $region72: #{positionwise_ff.1} parent=5 // pred_check_branch
        %329 = sbr.rel (%p326) target = $region74
      $region73: #{positionwise_ff.1} parent=5 // pred_region
        %s330 = ssub.s32 %s11, 1
        %s331 = sand.u32 %s62, 1
        %s332 = sand.u32 %s62, 1
        %s333 = smul.addr %s332, 128
        %s334 = scalar_lea.vmem [#allocation3], %s333
        // Predicated region
        $region75: #{positionwise_ff.1} parent=73 // pred_check
          %p335 = pneg %p75
        $region76: #{positionwise_ff.1} parent=73 // pred_check_branch
          %337 = sbr.rel (%p335) target = $region78
        $region77: #{positionwise_ff.1} parent=73 // pred_region
          _
        $region78: #{positionwise_ff.1} parent=73 // pred_fallthru
          _
        %s338 = smul.u32 32, %s20
        %p339 = scmp.lt.s32.totalorder %s338, 63
        %s340 = scalar_select %p339, %s338, 63
        %s341 = smul.addr %s340, 4
        %s342 = scalar_lea.vmem %s0, %s341
        %p343 = pneg %p49
        %p344 = pneg %p46
        %s345 = sand.u32 %s62, 1
        %s346 = sand.u32 %s62, 1
        %s347 = smul.addr %s346, 128
        %s348 = scalar_lea.vmem [#allocation3], %s347
        %p349 = pneg %p75
        %p350 = pneg %p72
        %s351 = smul.u32 2, %s21
        %p352 = scmp.lt.s32.totalorder %s351, 3
        %s353 = scalar_select %p352, %s351, 3
        %s354 = scalar_lea.vmem %s2, %s353
        %p355 = pneg %p101
        %p356 = pneg %p98
        %s357 = smul.u32 32, %s21
        %p358 = scmp.lt.s32.totalorder %s357, 63
        %s359 = scalar_select %p358, %s357, 63
        %s360 = smul.addr %s359, 4
        %s361 = scalar_lea.vmem %s3, %s360
        %p362 = pneg %p127
        %p363 = pneg %p124
        %p364 = pneg %p148
        %p365 = pneg %p145
        %p366 = pneg %p174
        %p367 = pneg %p171
        %s368 = smul.u32 32, %s20
        %p369 = scmp.lt.s32.totalorder %s368, 63
        %s370 = scalar_select %p369, %s368, 63
        %s371 = smul.addr %s370, 8
        %s372 = scalar_lea.vmem %s5, %s371
        %s373 = smul.u32 32, %s20
        %p374 = scmp.lt.s32.totalorder %s373, 63
        %s375 = scalar_select %p374, %s373, 63
        %s376 = smul.addr %s375, 4
        %s377 = scalar_lea.vmem %s0, %s376
        %s378 = smul.u32 32, %s20
        %s379 = smul.u32 2, %s21
        %s380 = smul.u32 2, %s21
        %p381 = scmp.lt.s32.totalorder %s380, 3
        %s382 = scalar_select %p381, %s380, 3
        %s383 = scalar_lea.vmem %s2, %s382
        %s384 = smul.u32 2, %s21
        %s385 = smul.u32 32, %s21
        %p386 = scmp.lt.s32.totalorder %s385, 63
        %s387 = scalar_select %p386, %s385, 63
        %s388 = smul.addr %s387, 4
        %s389 = scalar_lea.vmem %s3, %s388
        %s390 = smul.u32 32, %s21
        %s391 = smul.u32 32, %s20
        %p392 = scmp.lt.s32.totalorder %s391, 63
        %s393 = scalar_select %p392, %s391, 63
        %s394 = smul.addr %s393, 8
        %s395 = scalar_lea.vmem %s5, %s394
        %s396 = smul.u32 32, %s20
        %p398 = scmp.eq.s32.totalorder %s21, 0
        // Predicated region
        $region79: #{positionwise_ff.1} parent=73 // pred_check
          %p399 = pneg %p398
        $region80: #{positionwise_ff.1} parent=73 // pred_check_branch
          %401 = sbr.rel (%p399) target = $region82
        $region81: #{positionwise_ff.1} parent=73 // pred_region
          %402 = vst [vmem:[#allocation2] sm:$0xff] 0.0
          %403 = vst [vmem:[#allocation2 + $0x8] sm:$0xff] 0.0
          %404 = vst [vmem:[#allocation2 + $0x10] sm:$0xff] 0.0
          %405 = vst [vmem:[#allocation2 + $0x18] sm:$0xff] 0.0
          %406 = vst [vmem:[#allocation2 + $0x20] sm:$0xff] 0.0
          %407 = vst [vmem:[#allocation2 + $0x28] sm:$0xff] 0.0
          %408 = vst [vmem:[#allocation2 + $0x30] sm:$0xff] 0.0
          %409 = vst [vmem:[#allocation2 + $0x38] sm:$0xff] 0.0
          %410 = vst [vmem:[#allocation2 + $0x40] sm:$0xff] 0.0
          %411 = vst [vmem:[#allocation2 + $0x48] sm:$0xff] 0.0
          %412 = vst [vmem:[#allocation2 + $0x50] sm:$0xff] 0.0
          %413 = vst [vmem:[#allocation2 + $0x58] sm:$0xff] 0.0
          %414 = vst [vmem:[#allocation2 + $0x60] sm:$0xff] 0.0
          %415 = vst [vmem:[#allocation2 + $0x68] sm:$0xff] 0.0
          %416 = vst [vmem:[#allocation2 + $0x70] sm:$0xff] 0.0
          %417 = vst [vmem:[#allocation2 + $0x78] sm:$0xff] 0.0
          %418 = vst [vmem:[#allocation2 + $0x80] sm:$0xff] 0.0
          %419 = vst [vmem:[#allocation2 + $0x88] sm:$0xff] 0.0
          %420 = vst [vmem:[#allocation2 + $0x90] sm:$0xff] 0.0
          %421 = vst [vmem:[#allocation2 + $0x98] sm:$0xff] 0.0
          %422 = vst [vmem:[#allocation2 + $0xa0] sm:$0xff] 0.0
          %423 = vst [vmem:[#allocation2 + $0xa8] sm:$0xff] 0.0
          %424 = vst [vmem:[#allocation2 + $0xb0] sm:$0xff] 0.0
          %425 = vst [vmem:[#allocation2 + $0xb8] sm:$0xff] 0.0
          %426 = vst [vmem:[#allocation2 + $0xc0] sm:$0xff] 0.0
          %427 = vst [vmem:[#allocation2 + $0xc8] sm:$0xff] 0.0
          %428 = vst [vmem:[#allocation2 + $0xd0] sm:$0xff] 0.0
          %429 = vst [vmem:[#allocation2 + $0xd8] sm:$0xff] 0.0
          %430 = vst [vmem:[#allocation2 + $0xe0] sm:$0xff] 0.0
          %431 = vst [vmem:[#allocation2 + $0xe8] sm:$0xff] 0.0
          %432 = vst [vmem:[#allocation2 + $0xf0] sm:$0xff] 0.0
          %433 = vst [vmem:[#allocation2 + $0xf8] sm:$0xff] 0.0
        $region82: #{positionwise_ff.1} parent=73 // pred_fallthru
          _
        %v434 = vld [vmem:[%s377] sm:$0xf]
        %v435 = vld [vmem:[%s377 + $0x4] sm:$0xf]
        %v436 = vld [vmem:[%s377 + $0x8] sm:$0xf]
        %v437 = vld [vmem:[%s377 + $0xc] sm:$0xf]
        %v438 = vld [vmem:[%s377 + $0x10] sm:$0xf]
        %v439 = vld [vmem:[%s377 + $0x14] sm:$0xf]
        %v440 = vld [vmem:[%s377 + $0x18] sm:$0xf]
        %v441 = vld [vmem:[%s377 + $0x1c] sm:$0xf]
        %v442 = vld [vmem:[%s377 + $0x20] sm:$0xf]
        %v443 = vld [vmem:[%s377 + $0x24] sm:$0xf]
        %v444 = vld [vmem:[%s377 + $0x28] sm:$0xf]
        %v445 = vld [vmem:[%s377 + $0x2c] sm:$0xf]
        %v446 = vld [vmem:[%s377 + $0x30] sm:$0xf]
        %v447 = vld [vmem:[%s377 + $0x34] sm:$0xf]
        %v448 = vld [vmem:[%s377 + $0x38] sm:$0xf]
        %v449 = vld [vmem:[%s377 + $0x3c] sm:$0xf]
        %v450 = vld [vmem:[%s377 + $0x40] sm:$0xf]
        %v451 = vld [vmem:[%s377 + $0x44] sm:$0xf]
        %v452 = vld [vmem:[%s377 + $0x48] sm:$0xf]
        %v453 = vld [vmem:[%s377 + $0x4c] sm:$0xf]
        %v454 = vld [vmem:[%s377 + $0x50] sm:$0xf]
        %v455 = vld [vmem:[%s377 + $0x54] sm:$0xf]
        %v456 = vld [vmem:[%s377 + $0x58] sm:$0xf]
        %v457 = vld [vmem:[%s377 + $0x5c] sm:$0xf]
        %v458 = vld [vmem:[%s377 + $0x60] sm:$0xf]
        %v459 = vld [vmem:[%s377 + $0x64] sm:$0xf]
        %v460 = vld [vmem:[%s377 + $0x68] sm:$0xf]
        %v461 = vld [vmem:[%s377 + $0x6c] sm:$0xf]
        %v462 = vld [vmem:[%s377 + $0x70] sm:$0xf]
        %v463 = vld [vmem:[%s377 + $0x74] sm:$0xf]
        %v464 = vld [vmem:[%s377 + $0x78] sm:$0xf]
        %v465 = vld [vmem:[%s377 + $0x7c] sm:$0xf]
        %v466 = vld [vmem:[%s334] sm:$0xff]
        %v467 = vld [vmem:[%s334 + $0x8] sm:$0xff]
        %v468 = vld [vmem:[%s334 + $0x10] sm:$0xff]
        %v469 = vld [vmem:[%s334 + $0x18] sm:$0xff]
        %v470 = vld [vmem:[%s334 + $0x20] sm:$0xff]
        %v471 = vld [vmem:[%s334 + $0x28] sm:$0xff]
        %v472 = vld [vmem:[%s334 + $0x30] sm:$0xff]
        %v473 = vld [vmem:[%s334 + $0x38] sm:$0xff]
        %v474 = vld [vmem:[%s334 + $0x40] sm:$0xff]
        %v475 = vld [vmem:[%s334 + $0x48] sm:$0xff]
        %v476 = vld [vmem:[%s334 + $0x50] sm:$0xff]
        %v477 = vld [vmem:[%s334 + $0x58] sm:$0xff]
        %v478 = vld [vmem:[%s334 + $0x60] sm:$0xff]
        %v479 = vld [vmem:[%s334 + $0x68] sm:$0xff]
        %v480 = vld [vmem:[%s334 + $0x70] sm:$0xff]
        %v481 = vld [vmem:[%s334 + $0x78] sm:$0xff]
        %v482 = vld [vmem:[%s383] sm:$0x3]
        %v484 = vlaneseq
        %v485 = vshrl.u32 %v484, 7
        %v486 = vsub.s32 0, %v485
        %v487 = vrot.slane %v482, %v486
        %v488 = vlaneseq
        %v489 = vshrl.u32 %v488, 7
        %v490 = vsub.s32 1, %v489
        %v491 = vrot.slane %v482, %v490
        %v526 = vunpack.c.l.b16 %v434
        %v527 = vunpack.c.l.b16 %v435
        %v528 = vunpack.c.l.b16 %v436
        %v529 = vunpack.c.l.b16 %v437
        %v530 = vunpack.c.l.b16 %v438
        %v531 = vunpack.c.l.b16 %v439
        %v532 = vunpack.c.l.b16 %v440
        %v533 = vunpack.c.l.b16 %v441
        %v534 = vunpack.c.l.b16 %v442
        %v535 = vunpack.c.l.b16 %v443
        %v536 = vunpack.c.l.b16 %v444
        %v537 = vunpack.c.l.b16 %v445
        %v538 = vunpack.c.l.b16 %v446
        %v539 = vunpack.c.l.b16 %v447
        %v540 = vunpack.c.l.b16 %v448
        %v541 = vunpack.c.l.b16 %v449
        %v542 = vunpack.c.l.b16 %v450
        %v543 = vunpack.c.l.b16 %v451
        %v544 = vunpack.c.l.b16 %v452
        %v545 = vunpack.c.l.b16 %v453
        %v546 = vunpack.c.l.b16 %v454
        %v547 = vunpack.c.l.b16 %v455
        %v548 = vunpack.c.l.b16 %v456
        %v549 = vunpack.c.l.b16 %v457
        %v550 = vunpack.c.l.b16 %v458
        %v551 = vunpack.c.l.b16 %v459
        %v552 = vunpack.c.l.b16 %v460
        %v553 = vunpack.c.l.b16 %v461
        %v554 = vunpack.c.l.b16 %v462
        %v555 = vunpack.c.l.b16 %v463
        %v556 = vunpack.c.l.b16 %v464
        %v557 = vunpack.c.l.b16 %v465
        %v558 = vpack.c.b16 %v527, %v526
        %v559 = vpack.c.b16 %v529, %v528
        %v560 = vpack.c.b16 %v531, %v530
        %v561 = vpack.c.b16 %v533, %v532
        %v562 = vpack.c.b16 %v535, %v534
        %v563 = vpack.c.b16 %v537, %v536
        %v564 = vpack.c.b16 %v539, %v538
        %v565 = vpack.c.b16 %v541, %v540
        %v566 = vpack.c.b16 %v543, %v542
        %v567 = vpack.c.b16 %v545, %v544
        %v568 = vpack.c.b16 %v547, %v546
        %v569 = vpack.c.b16 %v549, %v548
        %v570 = vpack.c.b16 %v551, %v550
        %v571 = vpack.c.b16 %v553, %v552
        %v572 = vpack.c.b16 %v555, %v554
        %v573 = vpack.c.b16 %v557, %v556
        %v606 = vunpack.c.l.b16 %v466
        %v607 = vunpack.c.h.b16 %v466
        %v608 = vunpack.c.l.b16 %v467
        %v609 = vunpack.c.h.b16 %v467
        %v610 = vunpack.c.l.b16 %v468
        %v611 = vunpack.c.h.b16 %v468
        %v612 = vunpack.c.l.b16 %v469
        %v613 = vunpack.c.h.b16 %v469
        %v614 = vunpack.c.l.b16 %v470
        %v615 = vunpack.c.h.b16 %v470
        %v616 = vunpack.c.l.b16 %v471
        %v617 = vunpack.c.h.b16 %v471
        %v618 = vunpack.c.l.b16 %v472
        %v619 = vunpack.c.h.b16 %v472
        %v620 = vunpack.c.l.b16 %v473
        %v621 = vunpack.c.h.b16 %v473
        %v622 = vunpack.c.l.b16 %v474
        %v623 = vunpack.c.h.b16 %v474
        %v624 = vunpack.c.l.b16 %v475
        %v625 = vunpack.c.h.b16 %v475
        %v626 = vunpack.c.l.b16 %v476
        %v627 = vunpack.c.h.b16 %v476
        %v628 = vunpack.c.l.b16 %v477
        %v629 = vunpack.c.h.b16 %v477
        %v630 = vunpack.c.l.b16 %v478
        %v631 = vunpack.c.h.b16 %v478
        %v632 = vunpack.c.l.b16 %v479
        %v633 = vunpack.c.h.b16 %v479
        %v634 = vunpack.c.l.b16 %v480
        %v635 = vunpack.c.h.b16 %v480
        %v636 = vunpack.c.l.b16 %v481
        %v637 = vunpack.c.h.b16 %v481
        %v638 = vpack.c.b16 %v608, %v606
        %v639 = vpack.c.b16 %v609, %v607
        %v640 = vpack.c.b16 %v612, %v610
        %v641 = vpack.c.b16 %v613, %v611
        %v642 = vpack.c.b16 %v616, %v614
        %v643 = vpack.c.b16 %v617, %v615
        %v644 = vpack.c.b16 %v620, %v618
        %v645 = vpack.c.b16 %v621, %v619
        %v646 = vpack.c.b16 %v624, %v622
        %v647 = vpack.c.b16 %v625, %v623
        %v648 = vpack.c.b16 %v628, %v626
        %v649 = vpack.c.b16 %v629, %v627
        %v650 = vpack.c.b16 %v632, %v630
        %v651 = vpack.c.b16 %v633, %v631
        %v652 = vpack.c.b16 %v636, %v634
        %v653 = vpack.c.b16 %v637, %v635
        %670 = vmatprep.subr.bf16.mxu0 %v639
        %671 = vmatpush1.bf16.msra.mxu0 %v638
        %672 = vmatprep.subr.bf16.mxu0 %v641
        %673 = vmatpush1.bf16.msra.mxu0 %v640
        %674 = vmatprep.subr.bf16.mxu0 %v643
        %675 = vmatpush1.bf16.msra.mxu0 %v642
        %676 = vmatprep.subr.bf16.mxu0 %v645
        %677 = vmatpush1.bf16.msra.mxu0 %v644
        %678 = vmatprep.subr.bf16.mxu0 %v647
        %679 = vmatpush1.bf16.msra.mxu0 %v646
        %680 = vmatprep.subr.bf16.mxu0 %v649
        %681 = vmatpush1.bf16.msra.mxu0 %v648
        %682 = vmatprep.subr.bf16.mxu0 %v651
        %683 = vmatpush1.bf16.msra.mxu0 %v650
        %684 = vmatprep.subr.bf16.mxu0 %v653
        %685 = vmatpush1.bf16.msra.mxu0 %v652
        %686 = vmatprep.subr.bf16.mxu0 0
        %687 = vmatpush1.bf16.msra.mxu0 0
        %688 = vmatprep.subr.bf16.mxu0 0
        %689 = vmatpush1.bf16.msra.mxu0 0
        %690 = vmatprep.subr.bf16.mxu0 0
        %691 = vmatpush1.bf16.msra.mxu0 0
        %692 = vmatprep.subr.bf16.mxu0 0
        %693 = vmatpush1.bf16.msra.mxu0 0
        %694 = vmatprep.subr.bf16.mxu0 0
        %695 = vmatpush1.bf16.msra.mxu0 0
        %696 = vmatprep.subr.bf16.mxu0 0
        %697 = vmatpush1.bf16.msra.mxu0 0
        %698 = vmatprep.subr.bf16.mxu0 0
        %699 = vmatpush1.bf16.msra.mxu0 0
        %700 = vmatprep.subr.bf16.mxu0 0
        %701 = vmatpush1.bf16.msra.mxu0 0
        %702 = vmatprep.mubr.bf16.mxu0 0
        %703 = vmatmul.mubr.bf16.gmra.mrb[0].mxu0 %v558
        %v704 = vpop.f32.mrb[0].mxu0
        %v705 = vadd.f32 %v487, %v704
        %v706 = vpop.f32.mrb[0].mxu0
        %v707 = vadd.f32 %v491, %v706
        %v708 = vpop.f32.mrb[0].mxu0
        %v709 = vadd.f32 %v487, %v708
        %v710 = vpop.f32.mrb[0].mxu0
        %v711 = vadd.f32 %v491, %v710
        %712 = vmatprep.mubr.bf16.mxu0 0
        %713 = vmatmul.mubr.bf16.gmra.mrb[0].mxu0 %v559
        %v714 = vpop.f32.mrb[0].mxu0
        %v715 = vadd.f32 %v487, %v714
        %v716 = vpop.f32.mrb[0].mxu0
        %v717 = vadd.f32 %v491, %v716
        %v718 = vpop.f32.mrb[0].mxu0
        %v719 = vadd.f32 %v487, %v718
        %v720 = vpop.f32.mrb[0].mxu0
        %v721 = vadd.f32 %v491, %v720
        %722 = vmatprep.mubr.bf16.mxu0 0
        %723 = vmatmul.mubr.bf16.gmra.mrb[0].mxu0 %v560
        %v724 = vpop.f32.mrb[0].mxu0
        %v725 = vadd.f32 %v487, %v724
        %v726 = vpop.f32.mrb[0].mxu0
        %v727 = vadd.f32 %v491, %v726
        %v728 = vpop.f32.mrb[0].mxu0
        %v729 = vadd.f32 %v487, %v728
        %v730 = vpop.f32.mrb[0].mxu0
        %v731 = vadd.f32 %v491, %v730
        %732 = vmatprep.mubr.bf16.mxu0 0
        %733 = vmatmul.mubr.bf16.gmra.mrb[0].mxu0 %v561
        %v734 = vpop.f32.mrb[0].mxu0
        %v735 = vadd.f32 %v487, %v734
        %v736 = vpop.f32.mrb[0].mxu0
        %v737 = vadd.f32 %v491, %v736
        %v738 = vpop.f32.mrb[0].mxu0
        %v739 = vadd.f32 %v487, %v738
        %v740 = vpop.f32.mrb[0].mxu0
        %v741 = vadd.f32 %v491, %v740
        %742 = vmatprep.mubr.bf16.mxu0 0
        %743 = vmatmul.mubr.bf16.gmra.mrb[0].mxu0 %v562
        %v744 = vpop.f32.mrb[0].mxu0
        %v745 = vadd.f32 %v487, %v744
        %v746 = vpop.f32.mrb[0].mxu0
        %v747 = vadd.f32 %v491, %v746
        %v748 = vpop.f32.mrb[0].mxu0
        %v749 = vadd.f32 %v487, %v748
        %v750 = vpop.f32.mrb[0].mxu0
        %v751 = vadd.f32 %v491, %v750
        %752 = vmatprep.mubr.bf16.mxu0 0
        %753 = vmatmul.mubr.bf16.gmra.mrb[0].mxu0 %v563
        %v754 = vpop.f32.mrb[0].mxu0
        %v755 = vadd.f32 %v487, %v754
        %v756 = vpop.f32.mrb[0].mxu0
        %v757 = vadd.f32 %v491, %v756
        %v758 = vpop.f32.mrb[0].mxu0
        %v759 = vadd.f32 %v487, %v758
        %v760 = vpop.f32.mrb[0].mxu0
        %v761 = vadd.f32 %v491, %v760
        %762 = vmatprep.mubr.bf16.mxu0 0
        %763 = vmatmul.mubr.bf16.gmra.mrb[0].mxu0 %v564
        %v764 = vpop.f32.mrb[0].mxu0
        %v765 = vadd.f32 %v487, %v764
        %v766 = vpop.f32.mrb[0].mxu0
        %v767 = vadd.f32 %v491, %v766
        %v768 = vpop.f32.mrb[0].mxu0
        %v769 = vadd.f32 %v487, %v768
        %v770 = vpop.f32.mrb[0].mxu0
        %v771 = vadd.f32 %v491, %v770
        %772 = vmatprep.mubr.bf16.mxu0 0
        %773 = vmatmul.mubr.bf16.gmra.mrb[0].mxu0 %v565
        %v774 = vpop.f32.mrb[0].mxu0
        %v775 = vadd.f32 %v487, %v774
        %v776 = vpop.f32.mrb[0].mxu0
        %v777 = vadd.f32 %v491, %v776
        %v778 = vpop.f32.mrb[0].mxu0
        %v779 = vadd.f32 %v487, %v778
        %v780 = vpop.f32.mrb[0].mxu0
        %v781 = vadd.f32 %v491, %v780
        %782 = vmatprep.mubr.bf16.mxu0 0
        %783 = vmatmul.mubr.bf16.gmra.mrb[0].mxu0 %v566
        %v784 = vpop.f32.mrb[0].mxu0
        %v785 = vadd.f32 %v487, %v784
        %v786 = vpop.f32.mrb[0].mxu0
        %v787 = vadd.f32 %v491, %v786
        %v788 = vpop.f32.mrb[0].mxu0
        %v789 = vadd.f32 %v487, %v788
        %v790 = vpop.f32.mrb[0].mxu0
        %v791 = vadd.f32 %v491, %v790
        %792 = vmatprep.mubr.bf16.mxu0 0
        %793 = vmatmul.mubr.bf16.gmra.mrb[0].mxu0 %v567
        %v794 = vpop.f32.mrb[0].mxu0
        %v795 = vadd.f32 %v487, %v794
        %v796 = vpop.f32.mrb[0].mxu0
        %v797 = vadd.f32 %v491, %v796
        %v798 = vpop.f32.mrb[0].mxu0
        %v799 = vadd.f32 %v487, %v798
        %v800 = vpop.f32.mrb[0].mxu0
        %v801 = vadd.f32 %v491, %v800
        %802 = vmatprep.mubr.bf16.mxu0 0
        %803 = vmatmul.mubr.bf16.gmra.mrb[0].mxu0 %v568
        %v804 = vpop.f32.mrb[0].mxu0
        %v805 = vadd.f32 %v487, %v804
        %v806 = vpop.f32.mrb[0].mxu0
        %v807 = vadd.f32 %v491, %v806
        %v808 = vpop.f32.mrb[0].mxu0
        %v809 = vadd.f32 %v487, %v808
        %v810 = vpop.f32.mrb[0].mxu0
        %v811 = vadd.f32 %v491, %v810
        %812 = vmatprep.mubr.bf16.mxu0 0
        %813 = vmatmul.mubr.bf16.gmra.mrb[0].mxu0 %v569
        %v814 = vpop.f32.mrb[0].mxu0
        %v815 = vadd.f32 %v487, %v814
        %v816 = vpop.f32.mrb[0].mxu0
        %v817 = vadd.f32 %v491, %v816
        %v818 = vpop.f32.mrb[0].mxu0
        %v819 = vadd.f32 %v487, %v818
        %v820 = vpop.f32.mrb[0].mxu0
        %v821 = vadd.f32 %v491, %v820
        %822 = vmatprep.mubr.bf16.mxu0 0
        %823 = vmatmul.mubr.bf16.gmra.mrb[0].mxu0 %v570
        %v824 = vpop.f32.mrb[0].mxu0
        %v825 = vadd.f32 %v487, %v824
        %v826 = vpop.f32.mrb[0].mxu0
        %v827 = vadd.f32 %v491, %v826
        %v828 = vpop.f32.mrb[0].mxu0
        %v829 = vadd.f32 %v487, %v828
        %v830 = vpop.f32.mrb[0].mxu0
        %v831 = vadd.f32 %v491, %v830
        %832 = vmatprep.mubr.bf16.mxu0 0
        %833 = vmatmul.mubr.bf16.gmra.mrb[0].mxu0 %v571
        %v834 = vpop.f32.mrb[0].mxu0
        %v835 = vadd.f32 %v487, %v834
        %v836 = vpop.f32.mrb[0].mxu0
        %v837 = vadd.f32 %v491, %v836
        %v838 = vpop.f32.mrb[0].mxu0
        %v839 = vadd.f32 %v487, %v838
        %v840 = vpop.f32.mrb[0].mxu0
        %v841 = vadd.f32 %v491, %v840
        %842 = vmatprep.mubr.bf16.mxu0 0
        %843 = vmatmul.mubr.bf16.gmra.mrb[0].mxu0 %v572
        %v844 = vpop.f32.mrb[0].mxu0
        %v845 = vadd.f32 %v487, %v844
        %v846 = vpop.f32.mrb[0].mxu0
        %v847 = vadd.f32 %v491, %v846
        %v848 = vpop.f32.mrb[0].mxu0
        %v849 = vadd.f32 %v487, %v848
        %v850 = vpop.f32.mrb[0].mxu0
        %v851 = vadd.f32 %v491, %v850
        %852 = vmatprep.mubr.bf16.mxu0 0
        %853 = vmatmul.mubr.bf16.gmra.mrb[0].mxu0 %v573
        %v854 = vpop.f32.mrb[0].mxu0
        %v855 = vadd.f32 %v487, %v854
        %v856 = vpop.f32.mrb[0].mxu0
        %v857 = vadd.f32 %v491, %v856
        %v858 = vpop.f32.mrb[0].mxu0
        %v859 = vadd.f32 %v487, %v858
        %v860 = vpop.f32.mrb[0].mxu0
        %v861 = vadd.f32 %v491, %v860
        %862 = vdwg.mxu0
        %v863 = vmax.f32 %v705, 0.0
        %v864 = vmax.f32 %v707, 0.0
        %v865 = vmax.f32 %v709, 0.0
        %v866 = vmax.f32 %v711, 0.0
        %v867 = vmax.f32 %v715, 0.0
        %v868 = vmax.f32 %v717, 0.0
        %v869 = vmax.f32 %v719, 0.0
        %v870 = vmax.f32 %v721, 0.0
        %v871 = vmax.f32 %v725, 0.0
        %v872 = vmax.f32 %v727, 0.0
        %v873 = vmax.f32 %v729, 0.0
        %v874 = vmax.f32 %v731, 0.0
        %v875 = vmax.f32 %v735, 0.0
        %v876 = vmax.f32 %v737, 0.0
        %v877 = vmax.f32 %v739, 0.0
        %v878 = vmax.f32 %v741, 0.0
        %v879 = vmax.f32 %v745, 0.0
        %v880 = vmax.f32 %v747, 0.0
        %v881 = vmax.f32 %v749, 0.0
        %v882 = vmax.f32 %v751, 0.0
        %v883 = vmax.f32 %v755, 0.0
        %v884 = vmax.f32 %v757, 0.0
        %v885 = vmax.f32 %v759, 0.0
        %v886 = vmax.f32 %v761, 0.0
        %v887 = vmax.f32 %v765, 0.0
        %v888 = vmax.f32 %v767, 0.0
        %v889 = vmax.f32 %v769, 0.0
        %v890 = vmax.f32 %v771, 0.0
        %v891 = vmax.f32 %v775, 0.0
        %v892 = vmax.f32 %v777, 0.0
        %v893 = vmax.f32 %v779, 0.0
        %v894 = vmax.f32 %v781, 0.0
        %v895 = vmax.f32 %v785, 0.0
        %v896 = vmax.f32 %v787, 0.0
        %v897 = vmax.f32 %v789, 0.0
        %v898 = vmax.f32 %v791, 0.0
        %v899 = vmax.f32 %v795, 0.0
        %v900 = vmax.f32 %v797, 0.0
        %v901 = vmax.f32 %v799, 0.0
        %v902 = vmax.f32 %v801, 0.0
        %v903 = vmax.f32 %v805, 0.0
        %v904 = vmax.f32 %v807, 0.0
        %v905 = vmax.f32 %v809, 0.0
        %v906 = vmax.f32 %v811, 0.0
        %v907 = vmax.f32 %v815, 0.0
        %v908 = vmax.f32 %v817, 0.0
        %v909 = vmax.f32 %v819, 0.0
        %v910 = vmax.f32 %v821, 0.0
        %v911 = vmax.f32 %v825, 0.0
        %v912 = vmax.f32 %v827, 0.0
        %v913 = vmax.f32 %v829, 0.0
        %v914 = vmax.f32 %v831, 0.0
        %v915 = vmax.f32 %v835, 0.0
        %v916 = vmax.f32 %v837, 0.0
        %v917 = vmax.f32 %v839, 0.0
        %v918 = vmax.f32 %v841, 0.0
        %v919 = vmax.f32 %v845, 0.0
        %v920 = vmax.f32 %v847, 0.0
        %v921 = vmax.f32 %v849, 0.0
        %v922 = vmax.f32 %v851, 0.0
        %v923 = vmax.f32 %v855, 0.0
        %v924 = vmax.f32 %v857, 0.0
        %v925 = vmax.f32 %v859, 0.0
        %v926 = vmax.f32 %v861, 0.0
        %v927 = vld [vmem:[#allocation2] sm:$0xff]
        %v928 = vld [vmem:[#allocation2 + $0x8] sm:$0xff]
        %v929 = vld [vmem:[#allocation2 + $0x10] sm:$0xff]
        %v930 = vld [vmem:[#allocation2 + $0x18] sm:$0xff]
        %v931 = vld [vmem:[#allocation2 + $0x20] sm:$0xff]
        %v932 = vld [vmem:[#allocation2 + $0x28] sm:$0xff]
        %v933 = vld [vmem:[#allocation2 + $0x30] sm:$0xff]
        %v934 = vld [vmem:[#allocation2 + $0x38] sm:$0xff]
        %v935 = vld [vmem:[#allocation2 + $0x40] sm:$0xff]
        %v936 = vld [vmem:[#allocation2 + $0x48] sm:$0xff]
        %v937 = vld [vmem:[#allocation2 + $0x50] sm:$0xff]
        %v938 = vld [vmem:[#allocation2 + $0x58] sm:$0xff]
        %v939 = vld [vmem:[#allocation2 + $0x60] sm:$0xff]
        %v940 = vld [vmem:[#allocation2 + $0x68] sm:$0xff]
        %v941 = vld [vmem:[#allocation2 + $0x70] sm:$0xff]
        %v942 = vld [vmem:[#allocation2 + $0x78] sm:$0xff]
        %v943 = vld [vmem:[#allocation2 + $0x80] sm:$0xff]
        %v944 = vld [vmem:[#allocation2 + $0x88] sm:$0xff]
        %v945 = vld [vmem:[#allocation2 + $0x90] sm:$0xff]
        %v946 = vld [vmem:[#allocation2 + $0x98] sm:$0xff]
        %v947 = vld [vmem:[#allocation2 + $0xa0] sm:$0xff]
        %v948 = vld [vmem:[#allocation2 + $0xa8] sm:$0xff]
        %v949 = vld [vmem:[#allocation2 + $0xb0] sm:$0xff]
        %v950 = vld [vmem:[#allocation2 + $0xb8] sm:$0xff]
        %v951 = vld [vmem:[#allocation2 + $0xc0] sm:$0xff]
        %v952 = vld [vmem:[#allocation2 + $0xc8] sm:$0xff]
        %v953 = vld [vmem:[#allocation2 + $0xd0] sm:$0xff]
        %v954 = vld [vmem:[#allocation2 + $0xd8] sm:$0xff]
        %v955 = vld [vmem:[#allocation2 + $0xe0] sm:$0xff]
        %v956 = vld [vmem:[#allocation2 + $0xe8] sm:$0xff]
        %v957 = vld [vmem:[#allocation2 + $0xf0] sm:$0xff]
        %v958 = vld [vmem:[#allocation2 + $0xf8] sm:$0xff]
        %v959 = vpack.c.bf16 %v865, %v863
        %v960 = vpack.c.bf16 %v866, %v864
        %v961 = vpack.c.bf16 %v869, %v867
        %v962 = vpack.c.bf16 %v870, %v868
        %v963 = vpack.c.bf16 %v873, %v871
        %v964 = vpack.c.bf16 %v874, %v872
        %v965 = vpack.c.bf16 %v877, %v875
        %v966 = vpack.c.bf16 %v878, %v876
        %v967 = vpack.c.bf16 %v881, %v879
        %v968 = vpack.c.bf16 %v882, %v880
        %v969 = vpack.c.bf16 %v885, %v883
        %v970 = vpack.c.bf16 %v886, %v884
        %v971 = vpack.c.bf16 %v889, %v887
        %v972 = vpack.c.bf16 %v890, %v888
        %v973 = vpack.c.bf16 %v893, %v891
        %v974 = vpack.c.bf16 %v894, %v892
        %v975 = vpack.c.bf16 %v897, %v895
        %v976 = vpack.c.bf16 %v898, %v896
        %v977 = vpack.c.bf16 %v901, %v899
        %v978 = vpack.c.bf16 %v902, %v900
        %v979 = vpack.c.bf16 %v905, %v903
        %v980 = vpack.c.bf16 %v906, %v904
        %v981 = vpack.c.bf16 %v909, %v907
        %v982 = vpack.c.bf16 %v910, %v908
        %v983 = vpack.c.bf16 %v913, %v911
        %v984 = vpack.c.bf16 %v914, %v912
        %v985 = vpack.c.bf16 %v917, %v915
        %v986 = vpack.c.bf16 %v918, %v916
        %v987 = vpack.c.bf16 %v921, %v919
        %v988 = vpack.c.bf16 %v922, %v920
        %v989 = vpack.c.bf16 %v925, %v923
        %v990 = vpack.c.bf16 %v926, %v924
        %v991 = vld [vmem:[%s389] sm:$0xf]
        %v992 = vld [vmem:[%s389 + $0x4] sm:$0xf]
        %v993 = vld [vmem:[%s389 + $0x8] sm:$0xf]
        %v994 = vld [vmem:[%s389 + $0xc] sm:$0xf]
        %v995 = vld [vmem:[%s389 + $0x10] sm:$0xf]
        %v996 = vld [vmem:[%s389 + $0x14] sm:$0xf]
        %v997 = vld [vmem:[%s389 + $0x18] sm:$0xf]
        %v998 = vld [vmem:[%s389 + $0x1c] sm:$0xf]
        %v999 = vld [vmem:[%s389 + $0x20] sm:$0xf]
        %v1000 = vld [vmem:[%s389 + $0x24] sm:$0xf]
        %v1001 = vld [vmem:[%s389 + $0x28] sm:$0xf]
        %v1002 = vld [vmem:[%s389 + $0x2c] sm:$0xf]
        %v1003 = vld [vmem:[%s389 + $0x30] sm:$0xf]
        %v1004 = vld [vmem:[%s389 + $0x34] sm:$0xf]
        %v1005 = vld [vmem:[%s389 + $0x38] sm:$0xf]
        %v1006 = vld [vmem:[%s389 + $0x3c] sm:$0xf]
        %v1007 = vld [vmem:[%s389 + $0x40] sm:$0xf]
        %v1008 = vld [vmem:[%s389 + $0x44] sm:$0xf]
        %v1009 = vld [vmem:[%s389 + $0x48] sm:$0xf]
        %v1010 = vld [vmem:[%s389 + $0x4c] sm:$0xf]
        %v1011 = vld [vmem:[%s389 + $0x50] sm:$0xf]
        %v1012 = vld [vmem:[%s389 + $0x54] sm:$0xf]
        %v1013 = vld [vmem:[%s389 + $0x58] sm:$0xf]
        %v1014 = vld [vmem:[%s389 + $0x5c] sm:$0xf]
        %v1015 = vld [vmem:[%s389 + $0x60] sm:$0xf]
        %v1016 = vld [vmem:[%s389 + $0x64] sm:$0xf]
        %v1017 = vld [vmem:[%s389 + $0x68] sm:$0xf]
        %v1018 = vld [vmem:[%s389 + $0x6c] sm:$0xf]
        %v1019 = vld [vmem:[%s389 + $0x70] sm:$0xf]
        %v1020 = vld [vmem:[%s389 + $0x74] sm:$0xf]
        %v1021 = vld [vmem:[%s389 + $0x78] sm:$0xf]
        %v1022 = vld [vmem:[%s389 + $0x7c] sm:$0xf]
        %v1055 = vunpack.c.l.b16 %v991
        %v1056 = vunpack.c.l.b16 %v992
        %v1057 = vunpack.c.l.b16 %v993
        %v1058 = vunpack.c.l.b16 %v994
        %v1059 = vunpack.c.l.b16 %v995
        %v1060 = vunpack.c.l.b16 %v996
        %v1061 = vunpack.c.l.b16 %v997
        %v1062 = vunpack.c.l.b16 %v998
        %v1063 = vunpack.c.l.b16 %v999
        %v1064 = vunpack.c.l.b16 %v1000
        %v1065 = vunpack.c.l.b16 %v1001
        %v1066 = vunpack.c.l.b16 %v1002
        %v1067 = vunpack.c.l.b16 %v1003
        %v1068 = vunpack.c.l.b16 %v1004
        %v1069 = vunpack.c.l.b16 %v1005
        %v1070 = vunpack.c.l.b16 %v1006
        %v1071 = vunpack.c.l.b16 %v1007
        %v1072 = vunpack.c.l.b16 %v1008
        %v1073 = vunpack.c.l.b16 %v1009
        %v1074 = vunpack.c.l.b16 %v1010
        %v1075 = vunpack.c.l.b16 %v1011
        %v1076 = vunpack.c.l.b16 %v1012
        %v1077 = vunpack.c.l.b16 %v1013
        %v1078 = vunpack.c.l.b16 %v1014
        %v1079 = vunpack.c.l.b16 %v1015
        %v1080 = vunpack.c.l.b16 %v1016
        %v1081 = vunpack.c.l.b16 %v1017
        %v1082 = vunpack.c.l.b16 %v1018
        %v1083 = vunpack.c.l.b16 %v1019
        %v1084 = vunpack.c.l.b16 %v1020
        %v1085 = vunpack.c.l.b16 %v1021
        %v1086 = vunpack.c.l.b16 %v1022
        %v1087 = vpack.c.b16 %v1056, %v1055
        %v1088 = vpack.c.b16 %v1058, %v1057
        %v1089 = vpack.c.b16 %v1060, %v1059
        %v1090 = vpack.c.b16 %v1062, %v1061
        %v1091 = vpack.c.b16 %v1064, %v1063
        %v1092 = vpack.c.b16 %v1066, %v1065
        %v1093 = vpack.c.b16 %v1068, %v1067
        %v1094 = vpack.c.b16 %v1070, %v1069
        %v1095 = vpack.c.b16 %v1072, %v1071
        %v1096 = vpack.c.b16 %v1074, %v1073
        %v1097 = vpack.c.b16 %v1076, %v1075
        %v1098 = vpack.c.b16 %v1078, %v1077
        %v1099 = vpack.c.b16 %v1080, %v1079
        %v1100 = vpack.c.b16 %v1082, %v1081
        %v1101 = vpack.c.b16 %v1084, %v1083
        %v1102 = vpack.c.b16 %v1086, %v1085
        %1119 = vmatprep.subr.bf16.mxu0 0
        %1120 = vmatpush1.bf16.msra.mxu0 %v1087
        %1121 = vmatprep.subr.bf16.mxu0 0
        %1122 = vmatpush1.bf16.msra.mxu0 %v1088
        %1123 = vmatprep.subr.bf16.mxu0 0
        %1124 = vmatpush1.bf16.msra.mxu0 %v1089
        %1125 = vmatprep.subr.bf16.mxu0 0
        %1126 = vmatpush1.bf16.msra.mxu0 %v1090
        %1127 = vmatprep.subr.bf16.mxu0 0
        %1128 = vmatpush1.bf16.msra.mxu0 %v1091
        %1129 = vmatprep.subr.bf16.mxu0 0
        %1130 = vmatpush1.bf16.msra.mxu0 %v1092
        %1131 = vmatprep.subr.bf16.mxu0 0
        %1132 = vmatpush1.bf16.msra.mxu0 %v1093
        %1133 = vmatprep.subr.bf16.mxu0 0
        %1134 = vmatpush1.bf16.msra.mxu0 %v1094
        %1135 = vmatprep.subr.bf16.mxu0 0
        %1136 = vmatpush1.bf16.msra.mxu0 %v1095
        %1137 = vmatprep.subr.bf16.mxu0 0
        %1138 = vmatpush1.bf16.msra.mxu0 %v1096
        %1139 = vmatprep.subr.bf16.mxu0 0
        %1140 = vmatpush1.bf16.msra.mxu0 %v1097
        %1141 = vmatprep.subr.bf16.mxu0 0
        %1142 = vmatpush1.bf16.msra.mxu0 %v1098
        %1143 = vmatprep.subr.bf16.mxu0 0
        %1144 = vmatpush1.bf16.msra.mxu0 %v1099
        %1145 = vmatprep.subr.bf16.mxu0 0
        %1146 = vmatpush1.bf16.msra.mxu0 %v1100
        %1147 = vmatprep.subr.bf16.mxu0 0
        %1148 = vmatpush1.bf16.msra.mxu0 %v1101
        %1149 = vmatprep.subr.bf16.mxu0 0
        %1150 = vmatpush1.bf16.msra.mxu0 %v1102
        %1151 = vmatprep.mubr.bf16.mxu0 %v960
        %1152 = vmatmul.mubr.bf16.gmra.mrb[0].mxu0 %v959
        %v1153 = vpop.f32.mrb[0].mxu0
        %v1154 = vadd.f32 0.0, %v1153
        %v1155 = vpop.f32.mrb[0].mxu0
        %v1156 = vpop.f32.mrb[0].mxu0
        %v1157 = vadd.f32 0.0, %v1156
        %v1158 = vpop.f32.mrb[0].mxu0
        %1159 = vmatprep.mubr.bf16.mxu0 %v962
        %1160 = vmatmul.mubr.bf16.gmra.mrb[0].mxu0 %v961
        %v1161 = vpop.f32.mrb[0].mxu0
        %v1162 = vadd.f32 0.0, %v1161
        %v1163 = vpop.f32.mrb[0].mxu0
        %v1164 = vpop.f32.mrb[0].mxu0
        %v1165 = vadd.f32 0.0, %v1164
        %v1166 = vpop.f32.mrb[0].mxu0
        %1167 = vmatprep.mubr.bf16.mxu0 %v964
        %1168 = vmatmul.mubr.bf16.gmra.mrb[0].mxu0 %v963
        %v1169 = vpop.f32.mrb[0].mxu0
        %v1170 = vadd.f32 0.0, %v1169
        %v1171 = vpop.f32.mrb[0].mxu0
        %v1172 = vpop.f32.mrb[0].mxu0
        %v1173 = vadd.f32 0.0, %v1172
        %v1174 = vpop.f32.mrb[0].mxu0
        %1175 = vmatprep.mubr.bf16.mxu0 %v966
        %1176 = vmatmul.mubr.bf16.gmra.mrb[0].mxu0 %v965
        %v1177 = vpop.f32.mrb[0].mxu0
        %v1178 = vadd.f32 0.0, %v1177
        %v1179 = vpop.f32.mrb[0].mxu0
        %v1180 = vpop.f32.mrb[0].mxu0
        %v1181 = vadd.f32 0.0, %v1180
        %v1182 = vpop.f32.mrb[0].mxu0
        %1183 = vmatprep.mubr.bf16.mxu0 %v968
        %1184 = vmatmul.mubr.bf16.gmra.mrb[0].mxu0 %v967
        %v1185 = vpop.f32.mrb[0].mxu0
        %v1186 = vadd.f32 0.0, %v1185
        %v1187 = vpop.f32.mrb[0].mxu0
        %v1188 = vpop.f32.mrb[0].mxu0
        %v1189 = vadd.f32 0.0, %v1188
        %v1190 = vpop.f32.mrb[0].mxu0
        %1191 = vmatprep.mubr.bf16.mxu0 %v970
        %1192 = vmatmul.mubr.bf16.gmra.mrb[0].mxu0 %v969
        %v1193 = vpop.f32.mrb[0].mxu0
        %v1194 = vadd.f32 0.0, %v1193
        %v1195 = vpop.f32.mrb[0].mxu0
        %v1196 = vpop.f32.mrb[0].mxu0
        %v1197 = vadd.f32 0.0, %v1196
        %v1198 = vpop.f32.mrb[0].mxu0
        %1199 = vmatprep.mubr.bf16.mxu0 %v972
        %1200 = vmatmul.mubr.bf16.gmra.mrb[0].mxu0 %v971
        %v1201 = vpop.f32.mrb[0].mxu0
        %v1202 = vadd.f32 0.0, %v1201
        %v1203 = vpop.f32.mrb[0].mxu0
        %v1204 = vpop.f32.mrb[0].mxu0
        %v1205 = vadd.f32 0.0, %v1204
        %v1206 = vpop.f32.mrb[0].mxu0
        %1207 = vmatprep.mubr.bf16.mxu0 %v974
        %1208 = vmatmul.mubr.bf16.gmra.mrb[0].mxu0 %v973
        %v1209 = vpop.f32.mrb[0].mxu0
        %v1210 = vadd.f32 0.0, %v1209
        %v1211 = vpop.f32.mrb[0].mxu0
        %v1212 = vpop.f32.mrb[0].mxu0
        %v1213 = vadd.f32 0.0, %v1212
        %v1214 = vpop.f32.mrb[0].mxu0
        %1215 = vmatprep.mubr.bf16.mxu0 %v976
        %1216 = vmatmul.mubr.bf16.gmra.mrb[0].mxu0 %v975
        %v1217 = vpop.f32.mrb[0].mxu0
        %v1218 = vadd.f32 0.0, %v1217
        %v1219 = vpop.f32.mrb[0].mxu0
        %v1220 = vpop.f32.mrb[0].mxu0
        %v1221 = vadd.f32 0.0, %v1220
        %v1222 = vpop.f32.mrb[0].mxu0
        %1223 = vmatprep.mubr.bf16.mxu0 %v978
        %1224 = vmatmul.mubr.bf16.gmra.mrb[0].mxu0 %v977
        %v1225 = vpop.f32.mrb[0].mxu0
        %v1226 = vadd.f32 0.0, %v1225
        %v1227 = vpop.f32.mrb[0].mxu0
        %v1228 = vpop.f32.mrb[0].mxu0
        %v1229 = vadd.f32 0.0, %v1228
        %v1230 = vpop.f32.mrb[0].mxu0
        %1231 = vmatprep.mubr.bf16.mxu0 %v980
        %1232 = vmatmul.mubr.bf16.gmra.mrb[0].mxu0 %v979
        %v1233 = vpop.f32.mrb[0].mxu0
        %v1234 = vadd.f32 0.0, %v1233
        %v1235 = vpop.f32.mrb[0].mxu0
        %v1236 = vpop.f32.mrb[0].mxu0
        %v1237 = vadd.f32 0.0, %v1236
        %v1238 = vpop.f32.mrb[0].mxu0
        %1239 = vmatprep.mubr.bf16.mxu0 %v982
        %1240 = vmatmul.mubr.bf16.gmra.mrb[0].mxu0 %v981
        %v1241 = vpop.f32.mrb[0].mxu0
        %v1242 = vadd.f32 0.0, %v1241
        %v1243 = vpop.f32.mrb[0].mxu0
        %v1244 = vpop.f32.mrb[0].mxu0
        %v1245 = vadd.f32 0.0, %v1244
        %v1246 = vpop.f32.mrb[0].mxu0
        %1247 = vmatprep.mubr.bf16.mxu0 %v984
        %1248 = vmatmul.mubr.bf16.gmra.mrb[0].mxu0 %v983
        %v1249 = vpop.f32.mrb[0].mxu0
        %v1250 = vadd.f32 0.0, %v1249
        %v1251 = vpop.f32.mrb[0].mxu0
        %v1252 = vpop.f32.mrb[0].mxu0
        %v1253 = vadd.f32 0.0, %v1252
        %v1254 = vpop.f32.mrb[0].mxu0
        %1255 = vmatprep.mubr.bf16.mxu0 %v986
        %1256 = vmatmul.mubr.bf16.gmra.mrb[0].mxu0 %v985
        %v1257 = vpop.f32.mrb[0].mxu0
        %v1258 = vadd.f32 0.0, %v1257
        %v1259 = vpop.f32.mrb[0].mxu0
        %v1260 = vpop.f32.mrb[0].mxu0
        %v1261 = vadd.f32 0.0, %v1260
        %v1262 = vpop.f32.mrb[0].mxu0
        %1263 = vmatprep.mubr.bf16.mxu0 %v988
        %1264 = vmatmul.mubr.bf16.gmra.mrb[0].mxu0 %v987
        %v1265 = vpop.f32.mrb[0].mxu0
        %v1266 = vadd.f32 0.0, %v1265
        %v1267 = vpop.f32.mrb[0].mxu0
        %v1268 = vpop.f32.mrb[0].mxu0
        %v1269 = vadd.f32 0.0, %v1268
        %v1270 = vpop.f32.mrb[0].mxu0
        %1271 = vmatprep.mubr.bf16.mxu0 %v990
        %1272 = vmatmul.mubr.bf16.gmra.mrb[0].mxu0 %v989
        %v1273 = vpop.f32.mrb[0].mxu0
        %v1274 = vadd.f32 0.0, %v1273
        %v1275 = vpop.f32.mrb[0].mxu0
        %v1276 = vpop.f32.mrb[0].mxu0
        %v1277 = vadd.f32 0.0, %v1276
        %v1278 = vpop.f32.mrb[0].mxu0
        %1279 = vdwg.mxu0
        %v1280 = vadd.f32 %v927, %v1154
        %v1281 = vadd.f32 %v928, %v1157
        %v1282 = vadd.f32 %v929, %v1162
        %v1283 = vadd.f32 %v930, %v1165
        %v1284 = vadd.f32 %v931, %v1170
        %v1285 = vadd.f32 %v932, %v1173
        %v1286 = vadd.f32 %v933, %v1178
        %v1287 = vadd.f32 %v934, %v1181
        %v1288 = vadd.f32 %v935, %v1186
        %v1289 = vadd.f32 %v936, %v1189
        %v1290 = vadd.f32 %v937, %v1194
        %v1291 = vadd.f32 %v938, %v1197
        %v1292 = vadd.f32 %v939, %v1202
        %v1293 = vadd.f32 %v940, %v1205
        %v1294 = vadd.f32 %v941, %v1210
        %v1295 = vadd.f32 %v942, %v1213
        %v1296 = vadd.f32 %v943, %v1218
        %v1297 = vadd.f32 %v944, %v1221
        %v1298 = vadd.f32 %v945, %v1226
        %v1299 = vadd.f32 %v946, %v1229
        %v1300 = vadd.f32 %v947, %v1234
        %v1301 = vadd.f32 %v948, %v1237
        %v1302 = vadd.f32 %v949, %v1242
        %v1303 = vadd.f32 %v950, %v1245
        %v1304 = vadd.f32 %v951, %v1250
        %v1305 = vadd.f32 %v952, %v1253
        %v1306 = vadd.f32 %v953, %v1258
        %v1307 = vadd.f32 %v954, %v1261
        %v1308 = vadd.f32 %v955, %v1266
        %v1309 = vadd.f32 %v956, %v1269
        %v1310 = vadd.f32 %v957, %v1274
        %v1311 = vadd.f32 %v958, %v1277
        %1312 = vst [vmem:[#allocation2] sm:$0xff] %v1280
        %1313 = vst [vmem:[#allocation2 + $0x8] sm:$0xff] %v1281
        %1314 = vst [vmem:[#allocation2 + $0x10] sm:$0xff] %v1282
        %1315 = vst [vmem:[#allocation2 + $0x18] sm:$0xff] %v1283
        %1316 = vst [vmem:[#allocation2 + $0x20] sm:$0xff] %v1284
        %1317 = vst [vmem:[#allocation2 + $0x28] sm:$0xff] %v1285
        %1318 = vst [vmem:[#allocation2 + $0x30] sm:$0xff] %v1286
        %1319 = vst [vmem:[#allocation2 + $0x38] sm:$0xff] %v1287
        %1320 = vst [vmem:[#allocation2 + $0x40] sm:$0xff] %v1288
        %1321 = vst [vmem:[#allocation2 + $0x48] sm:$0xff] %v1289
        %1322 = vst [vmem:[#allocation2 + $0x50] sm:$0xff] %v1290
        %1323 = vst [vmem:[#allocation2 + $0x58] sm:$0xff] %v1291
        %1324 = vst [vmem:[#allocation2 + $0x60] sm:$0xff] %v1292
        %1325 = vst [vmem:[#allocation2 + $0x68] sm:$0xff] %v1293
        %1326 = vst [vmem:[#allocation2 + $0x70] sm:$0xff] %v1294
        %1327 = vst [vmem:[#allocation2 + $0x78] sm:$0xff] %v1295
        %1328 = vst [vmem:[#allocation2 + $0x80] sm:$0xff] %v1296
        %1329 = vst [vmem:[#allocation2 + $0x88] sm:$0xff] %v1297
        %1330 = vst [vmem:[#allocation2 + $0x90] sm:$0xff] %v1298
        %1331 = vst [vmem:[#allocation2 + $0x98] sm:$0xff] %v1299
        %1332 = vst [vmem:[#allocation2 + $0xa0] sm:$0xff] %v1300
        %1333 = vst [vmem:[#allocation2 + $0xa8] sm:$0xff] %v1301
        %1334 = vst [vmem:[#allocation2 + $0xb0] sm:$0xff] %v1302
        %1335 = vst [vmem:[#allocation2 + $0xb8] sm:$0xff] %v1303
        %1336 = vst [vmem:[#allocation2 + $0xc0] sm:$0xff] %v1304
        %1337 = vst [vmem:[#allocation2 + $0xc8] sm:$0xff] %v1305
        %1338 = vst [vmem:[#allocation2 + $0xd0] sm:$0xff] %v1306
        %1339 = vst [vmem:[#allocation2 + $0xd8] sm:$0xff] %v1307
        %1340 = vst [vmem:[#allocation2 + $0xe0] sm:$0xff] %v1308
        %1341 = vst [vmem:[#allocation2 + $0xe8] sm:$0xff] %v1309
        %1342 = vst [vmem:[#allocation2 + $0xf0] sm:$0xff] %v1310
        %1343 = vst [vmem:[#allocation2 + $0xf8] sm:$0xff] %v1311
        %p1344 = scmp.eq.s32.totalorder %s21, 1
        // Predicated region
        $region83: #{positionwise_ff.1} parent=73 // pred_check
          %p1345 = pneg %p1344
        $region84: #{positionwise_ff.1} parent=73 // pred_check_branch
          %1347 = sbr.rel (%p1345) target = $region86
        $region85: #{positionwise_ff.1} parent=73 // pred_region
          %v1348 = vld [vmem:[#allocation2] sm:$0xff]
          %v1349 = vld [vmem:[#allocation2 + $0x8] sm:$0xff]
          %v1350 = vld [vmem:[#allocation2 + $0x10] sm:$0xff]
          %v1351 = vld [vmem:[#allocation2 + $0x18] sm:$0xff]
          %v1352 = vld [vmem:[#allocation2 + $0x20] sm:$0xff]
          %v1353 = vld [vmem:[#allocation2 + $0x28] sm:$0xff]
          %v1354 = vld [vmem:[#allocation2 + $0x30] sm:$0xff]
          %v1355 = vld [vmem:[#allocation2 + $0x38] sm:$0xff]
          %v1356 = vld [vmem:[#allocation2 + $0x40] sm:$0xff]
          %v1357 = vld [vmem:[#allocation2 + $0x48] sm:$0xff]
          %v1358 = vld [vmem:[#allocation2 + $0x50] sm:$0xff]
          %v1359 = vld [vmem:[#allocation2 + $0x58] sm:$0xff]
          %v1360 = vld [vmem:[#allocation2 + $0x60] sm:$0xff]
          %v1361 = vld [vmem:[#allocation2 + $0x68] sm:$0xff]
          %v1362 = vld [vmem:[#allocation2 + $0x70] sm:$0xff]
          %v1363 = vld [vmem:[#allocation2 + $0x78] sm:$0xff]
          %v1364 = vld [vmem:[#allocation2 + $0x80] sm:$0xff]
          %v1365 = vld [vmem:[#allocation2 + $0x88] sm:$0xff]
          %v1366 = vld [vmem:[#allocation2 + $0x90] sm:$0xff]
          %v1367 = vld [vmem:[#allocation2 + $0x98] sm:$0xff]
          %v1368 = vld [vmem:[#allocation2 + $0xa0] sm:$0xff]
          %v1369 = vld [vmem:[#allocation2 + $0xa8] sm:$0xff]
          %v1370 = vld [vmem:[#allocation2 + $0xb0] sm:$0xff]
          %v1371 = vld [vmem:[#allocation2 + $0xb8] sm:$0xff]
          %v1372 = vld [vmem:[#allocation2 + $0xc0] sm:$0xff]
          %v1373 = vld [vmem:[#allocation2 + $0xc8] sm:$0xff]
          %v1374 = vld [vmem:[#allocation2 + $0xd0] sm:$0xff]
          %v1375 = vld [vmem:[#allocation2 + $0xd8] sm:$0xff]
          %v1376 = vld [vmem:[#allocation2 + $0xe0] sm:$0xff]
          %v1377 = vld [vmem:[#allocation2 + $0xe8] sm:$0xff]
          %v1378 = vld [vmem:[#allocation2 + $0xf0] sm:$0xff]
          %v1379 = vld [vmem:[#allocation2 + $0xf8] sm:$0xff]
          %v1380 = vld [vmem:[%s4] sm:$0x1]
          %v1382 = vlaneseq
          %v1383 = vshrl.u32 %v1382, 7
          %v1384 = vsub.s32 0, %v1383
          %v1385 = vrot.slane %v1380, %v1384
          %v1387 = vadd.f32 %v1348, %v1385
          %v1388 = vadd.f32 %v1349, %v1385
          %v1389 = vadd.f32 %v1350, %v1385
          %v1390 = vadd.f32 %v1351, %v1385
          %v1391 = vadd.f32 %v1352, %v1385
          %v1392 = vadd.f32 %v1353, %v1385
          %v1393 = vadd.f32 %v1354, %v1385
          %v1394 = vadd.f32 %v1355, %v1385
          %v1395 = vadd.f32 %v1356, %v1385
          %v1396 = vadd.f32 %v1357, %v1385
          %v1397 = vadd.f32 %v1358, %v1385
          %v1398 = vadd.f32 %v1359, %v1385
          %v1399 = vadd.f32 %v1360, %v1385
          %v1400 = vadd.f32 %v1361, %v1385
          %v1401 = vadd.f32 %v1362, %v1385
          %v1402 = vadd.f32 %v1363, %v1385
          %v1403 = vadd.f32 %v1364, %v1385
          %v1404 = vadd.f32 %v1365, %v1385
          %v1405 = vadd.f32 %v1366, %v1385
          %v1406 = vadd.f32 %v1367, %v1385
          %v1407 = vadd.f32 %v1368, %v1385
          %v1408 = vadd.f32 %v1369, %v1385
          %v1409 = vadd.f32 %v1370, %v1385
          %v1410 = vadd.f32 %v1371, %v1385
          %v1411 = vadd.f32 %v1372, %v1385
          %v1412 = vadd.f32 %v1373, %v1385
          %v1413 = vadd.f32 %v1374, %v1385
          %v1414 = vadd.f32 %v1375, %v1385
          %v1415 = vadd.f32 %v1376, %v1385
          %v1416 = vadd.f32 %v1377, %v1385
          %v1417 = vadd.f32 %v1378, %v1385
          %v1418 = vadd.f32 %v1379, %v1385
          %1419 = vst [vmem:[%s395] sm:$0xff] %v1387
          %1420 = vst [vmem:[%s395 + $0x8] sm:$0xff] %v1388
          %1421 = vst [vmem:[%s395 + $0x10] sm:$0xff] %v1389
          %1422 = vst [vmem:[%s395 + $0x18] sm:$0xff] %v1390
          %1423 = vst [vmem:[%s395 + $0x20] sm:$0xff] %v1391
          %1424 = vst [vmem:[%s395 + $0x28] sm:$0xff] %v1392
          %1425 = vst [vmem:[%s395 + $0x30] sm:$0xff] %v1393
          %1426 = vst [vmem:[%s395 + $0x38] sm:$0xff] %v1394
          %1427 = vst [vmem:[%s395 + $0x40] sm:$0xff] %v1395
          %1428 = vst [vmem:[%s395 + $0x48] sm:$0xff] %v1396
          %1429 = vst [vmem:[%s395 + $0x50] sm:$0xff] %v1397
          %1430 = vst [vmem:[%s395 + $0x58] sm:$0xff] %v1398
          %1431 = vst [vmem:[%s395 + $0x60] sm:$0xff] %v1399
          %1432 = vst [vmem:[%s395 + $0x68] sm:$0xff] %v1400
          %1433 = vst [vmem:[%s395 + $0x70] sm:$0xff] %v1401
          %1434 = vst [vmem:[%s395 + $0x78] sm:$0xff] %v1402
          %1435 = vst [vmem:[%s395 + $0x80] sm:$0xff] %v1403
          %1436 = vst [vmem:[%s395 + $0x88] sm:$0xff] %v1404
          %1437 = vst [vmem:[%s395 + $0x90] sm:$0xff] %v1405
          %1438 = vst [vmem:[%s395 + $0x98] sm:$0xff] %v1406
          %1439 = vst [vmem:[%s395 + $0xa0] sm:$0xff] %v1407
          %1440 = vst [vmem:[%s395 + $0xa8] sm:$0xff] %v1408
          %1441 = vst [vmem:[%s395 + $0xb0] sm:$0xff] %v1409
          %1442 = vst [vmem:[%s395 + $0xb8] sm:$0xff] %v1410
          %1443 = vst [vmem:[%s395 + $0xc0] sm:$0xff] %v1411
          %1444 = vst [vmem:[%s395 + $0xc8] sm:$0xff] %v1412
          %1445 = vst [vmem:[%s395 + $0xd0] sm:$0xff] %v1413
          %1446 = vst [vmem:[%s395 + $0xd8] sm:$0xff] %v1414
          %1447 = vst [vmem:[%s395 + $0xe0] sm:$0xff] %v1415
          %1448 = vst [vmem:[%s395 + $0xe8] sm:$0xff] %v1416
          %1449 = vst [vmem:[%s395 + $0xf0] sm:$0xff] %v1417
          %1450 = vst [vmem:[%s395 + $0xf8] sm:$0xff] %v1418
        $region86: #{positionwise_ff.1} parent=73 // pred_fallthru
          _
        %s1451 = smul.u32 32, %s20
        %p1452 = scmp.lt.s32.totalorder %s1451, 63
        %s1453 = scalar_select %p1452, %s1451, 63
        %s1454 = smul.addr %s1453, 8
        %s1455 = scalar_lea.vmem %s5, %s1454
        // Predicated region
        $region87: #{positionwise_ff.1} parent=73 // pred_check
          %p1456 = pneg %p171
        $region88: #{positionwise_ff.1} parent=73 // pred_check_branch
          %1458 = sbr.rel (%p1456) target = $region90
        $region89: #{positionwise_ff.1} parent=73 // pred_region
          %s1459 = smul.u32 32, %s20
        $region90: #{positionwise_ff.1} parent=73 // pred_fallthru
          _
      $region74: #{positionwise_ff.1} parent=5 // pred_fallthru
        _
      %p1460 = scmp.le.s32.totalorder 2, %s11
      // Predicated region
      $region91: #{positionwise_ff.1} parent=5 // pred_check
        %p1461 = pneg %p1460
      $region92: #{positionwise_ff.1} parent=5 // pred_check_branch
        %1463 = sbr.rel (%p1461) target = $region94
      $region93: #{positionwise_ff.1} parent=5 // pred_region
        %s1464 = ssub.s32 %s11, 2
        // Predicated region
        $region95: #{positionwise_ff.1} parent=93 // pred_check
          %p1465 = pneg %p177
        $region96: #{positionwise_ff.1} parent=93 // pred_check_branch
          %1467 = sbr.rel (%p1465) target = $region98
        $region97: #{positionwise_ff.1} parent=93 // pred_region
          %s1468 = smul.u32 32, %s22
          %p1469 = scmp.lt.s32.totalorder %s1468, 63
          %s1470 = scalar_select %p1469, %s1468, 63
          %s1471 = smul.addr %s1470, 8
          %s1472 = scalar_lea.vmem %s5, %s1471
        $region98: #{positionwise_ff.1} parent=93 // pred_fallthru
          _
      $region94: #{positionwise_ff.1} parent=5 // pred_fallthru
        _
    $region6: #{positionwise_ff.1} parent=1 // loop_footer
      %s15 = sadd.s32 1, %s11
    $region7: #{positionwise_ff.1} parent=1 // loop_footer_branch
      %10 = sbr.rel target = $region3
    $region8: #{positionwise_ff.1} parent=1 // loop_exit
      _

</llo_original>
